<compile_context>
chip_gen: v5e
topology: v5e:2x2
jax: 0.10.0
libtpu: 0.0.40
codegen_flags: <defaults>
</compile_context>

<pallas_src>
import jax
import jax.numpy as jnp
from jax.experimental import pallas as pl
from jax.experimental.pallas import tpu as pltpu

# ---------------- hyper-parameters (small, synthetic) ----------------
SRC_CHANNELS = 6
OUT_CHANNELS = 4
HIDDEN = 32
KERNEL_SIZE = 5
DILATION_RATE = 2
N_LAYERS = 4                   # module arg; each internal WN gets n_layers // 2
NLH = N_LAYERS // 2            # layers per WN
PRE_FILTER_K = 9
PRE_FILTER_STRIDE = 4

B = 2
T = 8                          # frame-rate sequence length
BT = B * T
L_FTR = PRE_FILTER_STRIDE * T  # raw (1-channel) filter-signal length
PRE_IN = SRC_CHANNELS + PRE_FILTER_K   # = 15
CENTER = (KERNEL_SIZE - 1) // 2


# ---------------- Pallas kernel ----------------
def _posterior_sf_kernel(
    x_in_ref,     # [BT, SRC+9]          f32  (x_src channels | pre_filter im2col patches)
    mask_ref,     # [BT, 1]              f32
    noise_ref,    # [BT, OUT]            f32
    valid_d_ref,  # [NLH, K, BT, 2H]     f32  tap validity, pre-broadcast (dual WN)
    valid_s_ref,  # [NLH, K, BT, H]      f32  tap validity, pre-broadcast (enc WN)
    pre_w_ref,    # [SRC+9, 2H]          bf16 block-diag(pre_source_w, pre_filter_w)
    pre_b_ref,    # [1, 2H]              f32
    ind_w_ref,    # [NLH, K*2H, 4H]      bf16 fused src/ftr gate conv (block-diag)
    ind_b_ref,    # [NLH, 1, 4H]         f32
    rsd_w_ref,    # [NLH, 2H, 4H]        bf16 fused src/ftr res|skip conv (block-diag)
    rsd_b_ref,    # [NLH, 1, 4H]         f32
    ins_w_ref,    # [NLH, K*H, 2H]       bf16 enc gate conv (tanh | sigmoid)
    ins_b_ref,    # [NLH, 1, 2H]         f32
    rss_w_ref,    # [NLH, H, 2H]         bf16 enc res | skip conv
    rss_b_ref,    # [NLH, 1, 2H]         f32
    proj_w_ref,   # [H, 2*OUT]           bf16 (m | logs)
    proj_b_ref,   # [1, 2*OUT]           f32
    out_ref,      # [BT, 3*OUT]          f32  (z | m | logs)
):
    f32, bf16, H = jnp.float32, jnp.bfloat16, HIDDEN
    H2 = 2 * H

    # hoisted mask broadcasts (JAX does not CSE broadcast_in_dim)
    mask1 = mask_ref[...]                                     # [BT, 1]
    mask_h = jnp.broadcast_to(mask1, (BT, H))                 # [BT, H]
    mask_2h = jnp.broadcast_to(mask1, (BT, H2))               # [BT, 2H]
    mask_s = jnp.broadcast_to(mask1, (BT, 2 * OUT_CHANNELS))  # [BT, 2*OUT]

    # fused pre_source (1x1 conv) + pre_filter (strided conv as im2col):
    # one block-diagonal matmul; columns are [h_src | h_ftr].
    pre = (jnp.dot(x_in_ref[...].astype(bf16), pre_w_ref[...],
                   preferred_element_type=f32) + pre_b_ref[...])       # [BT, 2H]
    x_dual = pre * mask_2h

    def taps_im2col(x, layer_idx, valid_ref):
        # "same" dilated conv taps gathered as [BT, K*C] via sublane rotation.
        # valid_ref zeroes taps whose source row is out of range or crosses a
        # batch boundary of the flattened [B*T] row axis, which makes the
        # wrap-around roll exactly equivalent to zero padding.
        d = DILATION_RATE ** layer_idx
        taps = []
        for tap in range(KERNEL_SIZE):
            s = (tap - CENTER) * d
            if s == 0:
                taps.append(x)
            else:
                rolled = pltpu.roll(x, shift=(-s) % BT, axis=0)
                taps.append(rolled * valid_ref[layer_idx, tap])
        return jnp.concatenate(taps, axis=1)

    # ---- fused dual WN: source_enc || filter_enc (block-diagonal weights) ----
    skip_d = None
    for i in range(NLH):
        col = taps_im2col(x_dual, i, valid_d_ref)                       # [BT, K*2H]
        gate = (jnp.dot(col.astype(bf16), ind_w_ref[i],
                        preferred_element_type=f32) + ind_b_ref[i])     # [BT, 4H]
        # cols: [tanh_src | tanh_ftr | sig_src | sig_ftr]
        acts = jnp.tanh(gate[:, :H2]) * jax.nn.sigmoid(gate[:, H2:])    # [BT, 2H]
        rs = (jnp.dot(acts.astype(bf16), rsd_w_ref[i],
                      preferred_element_type=f32) + rsd_b_ref[i])       # [BT, 4H]
        # cols: [res_src | res_ftr | skip_src | skip_ftr]
        if i < NLH - 1:
            x_dual = (x_dual + rs[:, :H2]) * mask_2h
        skip_d = rs[:, H2:] if skip_d is None else skip_d + rs[:, H2:]
    skip_d = skip_d * mask_2h
    x = skip_d[:, :H] + skip_d[:, H:]            # enc input = h_src + h_ftr  [BT, H]

    # ---- enc WN (single stack) ----
    skip = None
    for i in range(NLH):
        col = taps_im2col(x, i, valid_s_ref)                            # [BT, K*H]
        gate = (jnp.dot(col.astype(bf16), ins_w_ref[i],
                        preferred_element_type=f32) + ins_b_ref[i])     # [BT, 2H]
        acts = jnp.tanh(gate[:, :H]) * jax.nn.sigmoid(gate[:, H:])
        rs = (jnp.dot(acts.astype(bf16), rss_w_ref[i],
                      preferred_element_type=f32) + rss_b_ref[i])       # [BT, 2H]
        if i < NLH - 1:
            x = (x + rs[:, :H]) * mask_h
        skip = rs[:, H:] if skip is None else skip + rs[:, H:]
    h = skip * mask_h

    # merged proj (m | logs): one [BT, H] @ [H, 2*OUT] matmul
    stats = (jnp.dot(h.astype(bf16), proj_w_ref[...],
                     preferred_element_type=f32) + proj_b_ref[...]) * mask_s
    m_stat = stats[:, :OUT_CHANNELS]
    logs = stats[:, OUT_CHANNELS:]
    z = (m_stat + noise_ref[...] * jnp.exp(logs)) * mask1

    # single packed output store
    out_ref[...] = jnp.concatenate([z, m_stat, logs], axis=1).astype(out_ref.dtype)


# ---------------- wrapper glue ----------------
def _rep_spec(shape):
    zeros = (0,) * len(shape)
    return pl.BlockSpec(shape, lambda i, _z=zeros: _z)


def _make_filter_patches(x_ftr):
    # x_ftr: [B, 1, L_FTR]  ->  [B, T, 9] im2col (pure indexing, no arithmetic)
    xf = x_ftr[:, 0, :]
    xfp = jnp.pad(xf, ((0, 0), (PRE_FILTER_K // 2, PRE_FILTER_K // 2)))
    idx = (PRE_FILTER_STRIDE * jnp.arange(T)[:, None]
           + jnp.arange(PRE_FILTER_K)[None, :])
    return xfp[:, idx]


def _make_tap_valid(width):
    # [NLH, K, BT, width]: 1.0 iff the tap's source row lies inside the same
    # batch block of the flattened [B*T] row axis (block-diagonal conv mask).
    # Pre-broadcast to `width` lanes; constant-folded under jit.
    r = jnp.arange(BT)
    blk = r // T
    layers = []
    for i in range(NLH):
        d = DILATION_RATE ** i
        taps = []
        for tap in range(KERNEL_SIZE):
            s = (tap - CENTER) * d
            src = r + s
            ok = (src >= 0) & (src < BT) & (src // T == blk)
            taps.append(ok)
        layers.append(jnp.stack(taps))
    v = jnp.stack(layers).astype(jnp.float32)[..., None]     # [NLH, K, BT, 1]
    return jnp.broadcast_to(v, (NLH, KERNEL_SIZE, BT, width))


def _pack_kernel_weights(p):
    H = HIDDEN
    H2 = 2 * H
    bf16 = jnp.bfloat16

    # block-diagonal fused pre weight: x_src rows -> h_src cols, patch rows -> h_ftr cols
    pre_w = jnp.zeros((PRE_IN, H2), jnp.float32)
    pre_w = pre_w.at[:SRC_CHANNELS, :H].set(p["pre_src_w"])
    pre_w = pre_w.at[SRC_CHANNELS:, H:].set(p["pre_ftr_w"])
    pre_b = jnp.concatenate([p["pre_src_b"], p["pre_ftr_b"]], axis=1)

    in_w = p["in_w"]   # [3, NLH, K, H, 2H]  (last dim: tanh | sigmoid)
    in_b = p["in_b"]   # [3, NLH, 1, 2H]
    rs_w = p["rs_w"]   # [3, NLH, H, 2H]     (last dim: res | skip)
    rs_b = p["rs_b"]   # [3, NLH, 1, 2H]

    # fused source/filter gate conv, block-diagonal:
    # rows per tap: [src channels | ftr channels]; cols: [tanh_src|tanh_ftr|sig_src|sig_ftr]
    ind_w = jnp.zeros((NLH, KERNEL_SIZE, H2, 4 * H), jnp.float32)
    ind_w = ind_w.at[:, :, :H, 0:H].set(in_w[0, :, :, :, :H])
    ind_w = ind_w.at[:, :, :H, 2 * H:3 * H].set(in_w[0, :, :, :, H:])
    ind_w = ind_w.at[:, :, H:, H:2 * H].set(in_w[1, :, :, :, :H])
    ind_w = ind_w.at[:, :, H:, 3 * H:].set(in_w[1, :, :, :, H:])
    ind_w = ind_w.reshape(NLH, KERNEL_SIZE * H2, 4 * H)
    ind_b = jnp.concatenate([in_b[0, :, :, :H], in_b[1, :, :, :H],
                             in_b[0, :, :, H:], in_b[1, :, :, H:]], axis=-1)

    # fused source/filter res|skip conv, block-diagonal:
    # rows: [src acts | ftr acts]; cols: [res_src|res_ftr|skip_src|skip_ftr]
    rsd_w = jnp.zeros((NLH, H2, 4 * H), jnp.float32)
    rsd_w = rsd_w.at[:, :H, 0:H].set(rs_w[0, :, :, :H])
    rsd_w = rsd_w.at[:, :H, 2 * H:3 * H].set(rs_w[0, :, :, H:])
    rsd_w = rsd_w.at[:, H:, H:2 * H].set(rs_w[1, :, :, :H])
    rsd_w = rsd_w.at[:, H:, 3 * H:].set(rs_w[1, :, :, H:])
    rsd_b = jnp.concatenate([rs_b[0, :, :, :H], rs_b[1, :, :, :H],
                             rs_b[0, :, :, H:], rs_b[1, :, :, H:]], axis=-1)

    # enc WN (single stack), im2col row layout
    ins_w = in_w[2].reshape(NLH, KERNEL_SIZE * H, 2 * H)
    ins_b = in_b[2]
    rss_w = rs_w[2]
    rss_b = rs_b[2]

    return (pre_w.astype(bf16), pre_b,
            ind_w.astype(bf16), ind_b,
            rsd_w.astype(bf16), rsd_b,
            ins_w.astype(bf16), ins_b,
            rss_w.astype(bf16), rss_b,
            p["proj_w"].astype(bf16), p["proj_b"])


@jax.jit
def posterior_sf_encoder(x_src, x_ftr, x_mask, noise, params):
    """x_src: [B, SRC, T], x_ftr: [B, 1, 4*T], x_mask: [B, 1, T], noise: [B, T, OUT].
    Returns (z, m, logs), each [B, OUT, T] (PyTorch NCT convention)."""
    xs = jnp.transpose(x_src, (0, 2, 1)).astype(jnp.float32)           # [B, T, SRC]
    patches = _make_filter_patches(x_ftr.astype(jnp.float32))          # [B, T, 9]
    x_in = jnp.concatenate([xs, patches], axis=-1).reshape(BT, PRE_IN)
    mask = jnp.transpose(x_mask, (0, 2, 1)).astype(jnp.float32).reshape(BT, 1)
    noise_flat = jnp.reshape(noise.astype(jnp.float32), (BT, OUT_CHANNELS))
    valid_d = _make_tap_valid(2 * HIDDEN)
    valid_s = _make_tap_valid(HIDDEN)

    weights = _pack_kernel_weights(params)
    operands = (x_in, mask, noise_flat, valid_d, valid_s) + weights

    out = pl.pallas_call(
        _posterior_sf_kernel,
        grid=(1,),
        in_specs=[_rep_spec(a.shape) for a in operands],
        out_specs=_rep_spec((BT, 3 * OUT_CHANNELS)),
        out_shape=jax.ShapeDtypeStruct((BT, 3 * OUT_CHANNELS), jnp.float32),
        compiler_params=pltpu.CompilerParams(
            dimension_semantics=("arbitrary",)),
    )(*operands)

    out = out.reshape(B, T, 3 * OUT_CHANNELS)
    to_nct = lambda a: jnp.transpose(a, (0, 2, 1))
    z = to_nct(out[..., :OUT_CHANNELS])
    m = to_nct(out[..., OUT_CHANNELS:2 * OUT_CHANNELS])
    logs = to_nct(out[..., 2 * OUT_CHANNELS:])
    return z, m, logs


# ---------------- deterministic synthetic parameters ----------------
def init_params(key):
    scale = 0.1
    keys = jax.random.split(key, 10)

    def nrm(k, shape):
        return (scale * jax.random.normal(k, shape)).astype(jnp.float32)

    p = {
        "pre_src_w": nrm(keys[0], (SRC_CHANNELS, HIDDEN)),
        "pre_src_b": nrm(keys[1], (1, HIDDEN)),
        "pre_ftr_w": nrm(keys[2], (PRE_FILTER_K, HIDDEN)),
        "pre_ftr_b": nrm(keys[3], (1, HIDDEN)),
        # in_layers: Conv1d(H, 2H, K, dilation) -> [WN, layer, tap, in, out(tanh|sig)]
        "in_w": nrm(keys[4], (3, NLH, KERNEL_SIZE, HIDDEN, 2 * HIDDEN)),
        "in_b": nrm(keys[5], (3, NLH, 1, 2 * HIDDEN)),
        # res_skip_layers: Conv1d(H, 2H, 1) -> [WN, layer, in, out(res|skip)]
        "rs_w": nrm(keys[6], (3, NLH, HIDDEN, 2 * HIDDEN)),
        "rs_b": nrm(keys[7], (3, NLH, 1, 2 * HIDDEN)),
        # proj: Conv1d(H, 2*OUT, 1) -> [in, out(m|logs)]
        "proj_w": nrm(keys[8], (HIDDEN, 2 * OUT_CHANNELS)),
        "proj_b": nrm(keys[9], (1, 2 * OUT_CHANNELS)),
    }
    # last WN layer's res_skip conv has only `hidden` (skip) output channels
    p["rs_w"] = p["rs_w"].at[:, NLH - 1, :, :HIDDEN].set(0.0)
    p["rs_b"] = p["rs_b"].at[:, NLH - 1, :, :HIDDEN].set(0.0)
    return p


# ---------------- pure-JAX reference (for sanity checks) ----------------
def reference_forward(x_src, x_ftr, x_mask, noise, p, mxu_dtype=jnp.float32):
    hp = jax.lax.Precision.HIGHEST

    def dot(a, b):
        return jnp.einsum("btc,cd->btd", a.astype(mxu_dtype), b.astype(mxu_dtype),
                          precision=hp, preferred_element_type=jnp.float32)

    xs = jnp.transpose(x_src, (0, 2, 1)).astype(jnp.float32)
    mask = jnp.transpose(x_mask, (0, 2, 1)).astype(jnp.float32)
    patches = _make_filter_patches(x_ftr.astype(jnp.float32))

    h_src = (dot(xs, p["pre_src_w"]) + p["pre_src_b"]) * mask
    h_ftr = (dot(patches, p["pre_ftr_w"]) + p["pre_ftr_b"]) * mask

    def dconv(x, w, b, dilation):
        pad = dilation * (KERNEL_SIZE - 1) // 2
        xp = jnp.pad(x, ((0, 0), (pad, pad), (0, 0)))
        out = jnp.zeros((B, T, w.shape[-1]), jnp.float32)
        for tap in range(KERNEL_SIZE):
            out = out + dot(xp[:, tap * dilation: tap * dilation + T], w[tap])
        return out + b

    def wn(x, m_idx):
        out = jnp.zeros_like(x)
        for i in range(NLH):
            d = DILATION_RATE ** i
            pre = dconv(x, p["in_w"][m_idx, i], p["in_b"][m_idx, i], d)
            acts = jnp.tanh(pre[..., :HIDDEN]) * jax.nn.sigmoid(pre[..., HIDDEN:])
            rs = dot(acts, p["rs_w"][m_idx, i]) + p["rs_b"][m_idx, i]
            if i < NLH - 1:
                x = (x + rs[..., :HIDDEN]) * mask
            out = out + rs[..., HIDDEN:]
        return out * mask

    h = wn(wn(h_src, 0) + wn(h_ftr, 1), 2)
    stats = (dot(h, p["proj_w"]) + p["proj_b"]) * mask
    m_stat = stats[..., :OUT_CHANNELS]
    logs = stats[..., OUT_CHANNELS:]
    z = (m_stat + noise * jnp.exp(logs)) * mask
    to_nct = lambda a: jnp.transpose(a, (0, 2, 1))
    return to_nct(z), to_nct(m_stat), to_nct(logs)


# ---------------- main ----------------
if __name__ == "__main__":
    key = jax.random.PRNGKey(0)
    k_p, k_src, k_ftr, k_noise = jax.random.split(key, 4)

    params = init_params(k_p)
    x_src = jax.random.normal(k_src, (B, SRC_CHANNELS, T), jnp.float32)
    x_ftr = jax.random.normal(k_ftr, (B, 1, L_FTR), jnp.float32)
    lengths = jnp.array([T, 6])
    x_mask = (jnp.arange(T)[None, :] < lengths[:, None]).astype(jnp.float32)[:, None, :]
    noise = jax.random.normal(k_noise, (B, T, OUT_CHANNELS), jnp.float32)

    z, m, logs = posterior_sf_encoder(x_src, x_ftr, x_mask, noise, params)
    jax.block_until_ready((z, m, logs))

    # tight structural check vs a reference that emulates the kernel's bf16 MXU operands
    z_b, m_b, logs_b = reference_forward(x_src, x_ftr, x_mask, noise, params,
                                         mxu_dtype=jnp.bfloat16)
    err_b = max(float(jnp.max(jnp.abs(z - z_b))),
                float(jnp.max(jnp.abs(m - m_b))),
                float(jnp.max(jnp.abs(logs - logs_b))))
    # loose check vs full-f32 module semantics (allowed bf16 MXU-operand drift)
    z_r, m_r, logs_r = reference_forward(x_src, x_ftr, x_mask, noise, params,
                                         mxu_dtype=jnp.float32)
    err_f = max(float(jnp.max(jnp.abs(z - z_r))),
                float(jnp.max(jnp.abs(m - m_r))),
                float(jnp.max(jnp.abs(logs - logs_r))))

    assert jnp.all(jnp.isfinite(z)) and jnp.all(jnp.isfinite(m)) and jnp.all(jnp.isfinite(logs))
    assert z.shape == (B, OUT_CHANNELS, T) and m.shape == (B, OUT_CHANNELS, T)
    assert err_b < 5e-3, f"mismatch vs bf16-emulating reference: {err_b}"
    assert err_f < 5e-2, f"mismatch vs f32 reference: {err_f}"
    print("KERNEL_OK")
</pallas_src>

<mosaic_0001>
module attributes {stable_mosaic.version = 11 : i64} {
  func.func @_posterior_sf_kernel(%arg0: i32, %arg1: memref<16x15xf32, #tpu.memory_space<vmem>>, %arg2: memref<16x1xf32, #tpu.memory_space<vmem>>, %arg3: memref<16x4xf32, #tpu.memory_space<vmem>>, %arg4: memref<2x5x16x64xf32, #tpu.memory_space<vmem>>, %arg5: memref<2x5x16x32xf32, #tpu.memory_space<vmem>>, %arg6: memref<15x64xbf16, #tpu.memory_space<vmem>>, %arg7: memref<1x64xf32, #tpu.memory_space<vmem>>, %arg8: memref<2x320x128xbf16, #tpu.memory_space<vmem>>, %arg9: memref<2x1x128xf32, #tpu.memory_space<vmem>>, %arg10: memref<2x64x128xbf16, #tpu.memory_space<vmem>>, %arg11: memref<2x1x128xf32, #tpu.memory_space<vmem>>, %arg12: memref<2x160x64xbf16, #tpu.memory_space<vmem>>, %arg13: memref<2x1x64xf32, #tpu.memory_space<vmem>>, %arg14: memref<2x32x64xbf16, #tpu.memory_space<vmem>>, %arg15: memref<2x1x64xf32, #tpu.memory_space<vmem>>, %arg16: memref<32x8xbf16, #tpu.memory_space<vmem>>, %arg17: memref<1x8xf32, #tpu.memory_space<vmem>>, %arg18: memref<16x12xf32, #tpu.memory_space<vmem>>) attributes {dimension_semantics = [#tpu.dimension_semantics<arbitrary>], iteration_bounds = array<i64: 1>, scalar_prefetch = 0 : i64, scratch_operands = 0 : i64, tpu.core_type = #tpu.core_type<tc>, window_params = [{pipeline_mode = #tpu.pipeline_mode<synchronous>, transform_indices = @transform_0, window_bounds = array<i64: 16, 15>}, {pipeline_mode = #tpu.pipeline_mode<synchronous>, transform_indices = @transform_1, window_bounds = array<i64: 16, 1>}, {pipeline_mode = #tpu.pipeline_mode<synchronous>, transform_indices = @transform_2, window_bounds = array<i64: 16, 4>}, {pipeline_mode = #tpu.pipeline_mode<synchronous>, transform_indices = @transform_3, window_bounds = array<i64: 2, 5, 16, 64>}, {pipeline_mode = #tpu.pipeline_mode<synchronous>, transform_indices = @transform_4, window_bounds = array<i64: 2, 5, 16, 32>}, {pipeline_mode = #tpu.pipeline_mode<synchronous>, transform_indices = @transform_5, window_bounds = array<i64: 15, 64>}, {pipeline_mode = #tpu.pipeline_mode<synchronous>, transform_indices = @transform_6, window_bounds = array<i64: 1, 64>}, {pipeline_mode = #tpu.pipeline_mode<synchronous>, transform_indices = @transform_7, window_bounds = array<i64: 2, 320, 128>}, {pipeline_mode = #tpu.pipeline_mode<synchronous>, transform_indices = @transform_8, window_bounds = array<i64: 2, 1, 128>}, {pipeline_mode = #tpu.pipeline_mode<synchronous>, transform_indices = @transform_9, window_bounds = array<i64: 2, 64, 128>}, {pipeline_mode = #tpu.pipeline_mode<synchronous>, transform_indices = @transform_10, window_bounds = array<i64: 2, 1, 128>}, {pipeline_mode = #tpu.pipeline_mode<synchronous>, transform_indices = @transform_11, window_bounds = array<i64: 2, 160, 64>}, {pipeline_mode = #tpu.pipeline_mode<synchronous>, transform_indices = @transform_12, window_bounds = array<i64: 2, 1, 64>}, {pipeline_mode = #tpu.pipeline_mode<synchronous>, transform_indices = @transform_13, window_bounds = array<i64: 2, 32, 64>}, {pipeline_mode = #tpu.pipeline_mode<synchronous>, transform_indices = @transform_14, window_bounds = array<i64: 2, 1, 64>}, {pipeline_mode = #tpu.pipeline_mode<synchronous>, transform_indices = @transform_15, window_bounds = array<i64: 32, 8>}, {pipeline_mode = #tpu.pipeline_mode<synchronous>, transform_indices = @transform_16, window_bounds = array<i64: 1, 8>}, {pipeline_mode = #tpu.pipeline_mode<synchronous>, transform_indices = @transform_17, window_bounds = array<i64: 16, 12>}]} {
    %c0 = arith.constant 0 : index
    %c0_0 = arith.constant 0 : index
    %0 = vector.load %arg2[%c0, %c0_0] : memref<16x1xf32, #tpu.memory_space<vmem>>, vector<16x1xf32>
    %1 = vector.shape_cast %0 : vector<16x1xf32> to vector<16x1xf32>
    %2 = vector.broadcast %1 : vector<16x1xf32> to vector<16x32xf32>
    %3 = vector.shape_cast %0 : vector<16x1xf32> to vector<16x1xf32>
    %4 = vector.broadcast %3 : vector<16x1xf32> to vector<16x64xf32>
    %5 = vector.shape_cast %0 : vector<16x1xf32> to vector<16x1xf32>
    %6 = vector.broadcast %5 : vector<16x1xf32> to vector<16x8xf32>
    %c0_1 = arith.constant 0 : index
    %c0_2 = arith.constant 0 : index
    %7 = vector.load %arg1[%c0_1, %c0_2] : memref<16x15xf32, #tpu.memory_space<vmem>>, vector<16x15xf32>
    %8 = arith.truncf %7 : vector<16x15xf32> to vector<16x15xbf16>
    %c0_3 = arith.constant 0 : index
    %c0_4 = arith.constant 0 : index
    %9 = vector.load %arg6[%c0_3, %c0_4] : memref<15x64xbf16, #tpu.memory_space<vmem>>, vector<15x64xbf16>
    %cst = arith.constant dense<0.000000e+00> : vector<16x64xf32>
    %10 = tpu.matmul %8, %9, %cst {dimension_numbers = #tpu.dot_dimension_numbers<[1], [0], [0], [1], [0, 0, 1, 1], [], []>} : vector<16x15xbf16>, vector<15x64xbf16>, vector<16x64xf32> -> vector<16x64xf32>
    %c0_5 = arith.constant 0 : index
    %c0_6 = arith.constant 0 : index
    %11 = vector.load %arg7[%c0_5, %c0_6] : memref<1x64xf32, #tpu.memory_space<vmem>>, vector<1x64xf32>
    %12 = vector.broadcast %11 : vector<1x64xf32> to vector<16x64xf32>
    %13 = arith.addf %10, %12 : vector<16x64xf32>
    %14 = arith.mulf %13, %4 : vector<16x64xf32>
    %c2_i32 = arith.constant 2 : i32
    %15 = tpu.dynamic_rotate %14 by %c2_i32 dim 0 : vector<16x64xf32>, i32 -> vector<16x64xf32>
    %c0_7 = arith.constant 0 : index
    %c0_8 = arith.constant 0 : index
    %c0_9 = arith.constant 0 : index
    %c0_10 = arith.constant 0 : index
    %16 = vector.load %arg4[%c0_7, %c0_8, %c0_9, %c0_10] : memref<2x5x16x64xf32, #tpu.memory_space<vmem>>, vector<1x1x16x64xf32>
    %17 = vector.shape_cast %16 : vector<1x1x16x64xf32> to vector<16x64xf32>
    %18 = arith.mulf %15, %17 : vector<16x64xf32>
    %c1_i32 = arith.constant 1 : i32
    %19 = tpu.dynamic_rotate %14 by %c1_i32 dim 0 : vector<16x64xf32>, i32 -> vector<16x64xf32>
    %c0_11 = arith.constant 0 : index
    %c1 = arith.constant 1 : index
    %c0_12 = arith.constant 0 : index
    %c0_13 = arith.constant 0 : index
    %20 = vector.load %arg4[%c0_11, %c1, %c0_12, %c0_13] : memref<2x5x16x64xf32, #tpu.memory_space<vmem>>, vector<1x1x16x64xf32>
    %21 = vector.shape_cast %20 : vector<1x1x16x64xf32> to vector<16x64xf32>
    %22 = arith.mulf %19, %21 : vector<16x64xf32>
    %c15_i32 = arith.constant 15 : i32
    %23 = tpu.dynamic_rotate %14 by %c15_i32 dim 0 : vector<16x64xf32>, i32 -> vector<16x64xf32>
    %c0_14 = arith.constant 0 : index
    %c3 = arith.constant 3 : index
    %c0_15 = arith.constant 0 : index
    %c0_16 = arith.constant 0 : index
    %24 = vector.load %arg4[%c0_14, %c3, %c0_15, %c0_16] : memref<2x5x16x64xf32, #tpu.memory_space<vmem>>, vector<1x1x16x64xf32>
    %25 = vector.shape_cast %24 : vector<1x1x16x64xf32> to vector<16x64xf32>
    %26 = arith.mulf %23, %25 : vector<16x64xf32>
    %c14_i32 = arith.constant 14 : i32
    %27 = tpu.dynamic_rotate %14 by %c14_i32 dim 0 : vector<16x64xf32>, i32 -> vector<16x64xf32>
    %c0_17 = arith.constant 0 : index
    %c4 = arith.constant 4 : index
    %c0_18 = arith.constant 0 : index
    %c0_19 = arith.constant 0 : index
    %28 = vector.load %arg4[%c0_17, %c4, %c0_18, %c0_19] : memref<2x5x16x64xf32, #tpu.memory_space<vmem>>, vector<1x1x16x64xf32>
    %29 = vector.shape_cast %28 : vector<1x1x16x64xf32> to vector<16x64xf32>
    %30 = arith.mulf %27, %29 : vector<16x64xf32>
    %31 = tpu.concatenate %18, %22, %14, %26, %30 in 1 : vector<16x64xf32>, vector<16x64xf32>, vector<16x64xf32>, vector<16x64xf32>, vector<16x64xf32> -> vector<16x320xf32>
    %32 = arith.truncf %31 : vector<16x320xf32> to vector<16x320xbf16>
    %c0_20 = arith.constant 0 : index
    %c0_21 = arith.constant 0 : index
    %c0_22 = arith.constant 0 : index
    %33 = vector.load %arg8[%c0_20, %c0_21, %c0_22] : memref<2x320x128xbf16, #tpu.memory_space<vmem>>, vector<1x320x128xbf16>
    %34 = vector.shape_cast %33 : vector<1x320x128xbf16> to vector<320x128xbf16>
    %cst_23 = arith.constant dense<0.000000e+00> : vector<16x128xf32>
    %35 = tpu.matmul %32, %34, %cst_23 {dimension_numbers = #tpu.dot_dimension_numbers<[1], [0], [0], [1], [0, 0, 1, 1], [], []>} : vector<16x320xbf16>, vector<320x128xbf16>, vector<16x128xf32> -> vector<16x128xf32>
    %c0_24 = arith.constant 0 : index
    %c0_25 = arith.constant 0 : index
    %c0_26 = arith.constant 0 : index
    %36 = vector.load %arg9[%c0_24, %c0_25, %c0_26] : memref<2x1x128xf32, #tpu.memory_space<vmem>>, vector<1x1x128xf32>
    %37 = vector.shape_cast %36 : vector<1x1x128xf32> to vector<1x128xf32>
    %38 = vector.broadcast %37 : vector<1x128xf32> to vector<16x128xf32>
    %39 = arith.addf %35, %38 : vector<16x128xf32>
    %40 = vector.extract_strided_slice %39 {offsets = [0, 0], sizes = [16, 64], strides = [1, 1]} : vector<16x128xf32> to vector<16x64xf32>
    %41 = math.tanh %40 : vector<16x64xf32>
    %42 = vector.extract_strided_slice %39 {offsets = [0, 64], sizes = [16, 64], strides = [1, 1]} : vector<16x128xf32> to vector<16x64xf32>
    %43 = arith.negf %42 : vector<16x64xf32>
    %44 = math.exp %43 : vector<16x64xf32>
    %cst_27 = arith.constant 1.000000e+00 : f32
    %45 = vector.broadcast %cst_27 : f32 to vector<16x64xf32>
    %46 = arith.addf %45, %44 : vector<16x64xf32>
    %47 = arith.divf %45, %46 : vector<16x64xf32>
    %48 = arith.mulf %41, %47 : vector<16x64xf32>
    %49 = arith.truncf %48 : vector<16x64xf32> to vector<16x64xbf16>
    %c0_28 = arith.constant 0 : index
    %c0_29 = arith.constant 0 : index
    %c0_30 = arith.constant 0 : index
    %50 = vector.load %arg10[%c0_28, %c0_29, %c0_30] : memref<2x64x128xbf16, #tpu.memory_space<vmem>>, vector<1x64x128xbf16>
    %51 = vector.shape_cast %50 : vector<1x64x128xbf16> to vector<64x128xbf16>
    %cst_31 = arith.constant dense<0.000000e+00> : vector<16x128xf32>
    %52 = tpu.matmul %49, %51, %cst_31 {dimension_numbers = #tpu.dot_dimension_numbers<[1], [0], [0], [1], [0, 0, 1, 1], [], []>} : vector<16x64xbf16>, vector<64x128xbf16>, vector<16x128xf32> -> vector<16x128xf32>
    %c0_32 = arith.constant 0 : index
    %c0_33 = arith.constant 0 : index
    %c0_34 = arith.constant 0 : index
    %53 = vector.load %arg11[%c0_32, %c0_33, %c0_34] : memref<2x1x128xf32, #tpu.memory_space<vmem>>, vector<1x1x128xf32>
    %54 = vector.shape_cast %53 : vector<1x1x128xf32> to vector<1x128xf32>
    %55 = vector.broadcast %54 : vector<1x128xf32> to vector<16x128xf32>
    %56 = arith.addf %52, %55 : vector<16x128xf32>
    %57 = vector.extract_strided_slice %56 {offsets = [0, 0], sizes = [16, 64], strides = [1, 1]} : vector<16x128xf32> to vector<16x64xf32>
    %58 = arith.addf %14, %57 : vector<16x64xf32>
    %59 = arith.mulf %58, %4 : vector<16x64xf32>
    %60 = vector.extract_strided_slice %56 {offsets = [0, 64], sizes = [16, 64], strides = [1, 1]} : vector<16x128xf32> to vector<16x64xf32>
    %c4_i32 = arith.constant 4 : i32
    %61 = tpu.dynamic_rotate %59 by %c4_i32 dim 0 : vector<16x64xf32>, i32 -> vector<16x64xf32>
    %c1_35 = arith.constant 1 : index
    %c0_36 = arith.constant 0 : index
    %c0_37 = arith.constant 0 : index
    %c0_38 = arith.constant 0 : index
    %62 = vector.load %arg4[%c1_35, %c0_36, %c0_37, %c0_38] : memref<2x5x16x64xf32, #tpu.memory_space<vmem>>, vector<1x1x16x64xf32>
    %63 = vector.shape_cast %62 : vector<1x1x16x64xf32> to vector<16x64xf32>
    %64 = arith.mulf %61, %63 : vector<16x64xf32>
    %c2_i32_39 = arith.constant 2 : i32
    %65 = tpu.dynamic_rotate %59 by %c2_i32_39 dim 0 : vector<16x64xf32>, i32 -> vector<16x64xf32>
    %c1_40 = arith.constant 1 : index
    %c1_41 = arith.constant 1 : index
    %c0_42 = arith.constant 0 : index
    %c0_43 = arith.constant 0 : index
    %66 = vector.load %arg4[%c1_40, %c1_41, %c0_42, %c0_43] : memref<2x5x16x64xf32, #tpu.memory_space<vmem>>, vector<1x1x16x64xf32>
    %67 = vector.shape_cast %66 : vector<1x1x16x64xf32> to vector<16x64xf32>
    %68 = arith.mulf %65, %67 : vector<16x64xf32>
    %c14_i32_44 = arith.constant 14 : i32
    %69 = tpu.dynamic_rotate %59 by %c14_i32_44 dim 0 : vector<16x64xf32>, i32 -> vector<16x64xf32>
    %c1_45 = arith.constant 1 : index
    %c3_46 = arith.constant 3 : index
    %c0_47 = arith.constant 0 : index
    %c0_48 = arith.constant 0 : index
    %70 = vector.load %arg4[%c1_45, %c3_46, %c0_47, %c0_48] : memref<2x5x16x64xf32, #tpu.memory_space<vmem>>, vector<1x1x16x64xf32>
    %71 = vector.shape_cast %70 : vector<1x1x16x64xf32> to vector<16x64xf32>
    %72 = arith.mulf %69, %71 : vector<16x64xf32>
    %c12_i32 = arith.constant 12 : i32
    %73 = tpu.dynamic_rotate %59 by %c12_i32 dim 0 : vector<16x64xf32>, i32 -> vector<16x64xf32>
    %c1_49 = arith.constant 1 : index
    %c4_50 = arith.constant 4 : index
    %c0_51 = arith.constant 0 : index
    %c0_52 = arith.constant 0 : index
    %74 = vector.load %arg4[%c1_49, %c4_50, %c0_51, %c0_52] : memref<2x5x16x64xf32, #tpu.memory_space<vmem>>, vector<1x1x16x64xf32>
    %75 = vector.shape_cast %74 : vector<1x1x16x64xf32> to vector<16x64xf32>
    %76 = arith.mulf %73, %75 : vector<16x64xf32>
    %77 = tpu.concatenate %64, %68, %59, %72, %76 in 1 : vector<16x64xf32>, vector<16x64xf32>, vector<16x64xf32>, vector<16x64xf32>, vector<16x64xf32> -> vector<16x320xf32>
    %78 = arith.truncf %77 : vector<16x320xf32> to vector<16x320xbf16>
    %c1_53 = arith.constant 1 : index
    %c0_54 = arith.constant 0 : index
    %c0_55 = arith.constant 0 : index
    %79 = vector.load %arg8[%c1_53, %c0_54, %c0_55] : memref<2x320x128xbf16, #tpu.memory_space<vmem>>, vector<1x320x128xbf16>
    %80 = vector.shape_cast %79 : vector<1x320x128xbf16> to vector<320x128xbf16>
    %cst_56 = arith.constant dense<0.000000e+00> : vector<16x128xf32>
    %81 = tpu.matmul %78, %80, %cst_56 {dimension_numbers = #tpu.dot_dimension_numbers<[1], [0], [0], [1], [0, 0, 1, 1], [], []>} : vector<16x320xbf16>, vector<320x128xbf16>, vector<16x128xf32> -> vector<16x128xf32>
    %c1_57 = arith.constant 1 : index
    %c0_58 = arith.constant 0 : index
    %c0_59 = arith.constant 0 : index
    %82 = vector.load %arg9[%c1_57, %c0_58, %c0_59] : memref<2x1x128xf32, #tpu.memory_space<vmem>>, vector<1x1x128xf32>
    %83 = vector.shape_cast %82 : vector<1x1x128xf32> to vector<1x128xf32>
    %84 = vector.broadcast %83 : vector<1x128xf32> to vector<16x128xf32>
    %85 = arith.addf %81, %84 : vector<16x128xf32>
    %86 = vector.extract_strided_slice %85 {offsets = [0, 0], sizes = [16, 64], strides = [1, 1]} : vector<16x128xf32> to vector<16x64xf32>
    %87 = math.tanh %86 : vector<16x64xf32>
    %88 = vector.extract_strided_slice %85 {offsets = [0, 64], sizes = [16, 64], strides = [1, 1]} : vector<16x128xf32> to vector<16x64xf32>
    %89 = arith.negf %88 : vector<16x64xf32>
    %90 = math.exp %89 : vector<16x64xf32>
    %cst_60 = arith.constant 1.000000e+00 : f32
    %91 = vector.broadcast %cst_60 : f32 to vector<16x64xf32>
    %92 = arith.addf %91, %90 : vector<16x64xf32>
    %93 = arith.divf %91, %92 : vector<16x64xf32>
    %94 = arith.mulf %87, %93 : vector<16x64xf32>
    %95 = arith.truncf %94 : vector<16x64xf32> to vector<16x64xbf16>
    %c1_61 = arith.constant 1 : index
    %c0_62 = arith.constant 0 : index
    %c0_63 = arith.constant 0 : index
    %96 = vector.load %arg10[%c1_61, %c0_62, %c0_63] : memref<2x64x128xbf16, #tpu.memory_space<vmem>>, vector<1x64x128xbf16>
    %97 = vector.shape_cast %96 : vector<1x64x128xbf16> to vector<64x128xbf16>
    %cst_64 = arith.constant dense<0.000000e+00> : vector<16x128xf32>
    %98 = tpu.matmul %95, %97, %cst_64 {dimension_numbers = #tpu.dot_dimension_numbers<[1], [0], [0], [1], [0, 0, 1, 1], [], []>} : vector<16x64xbf16>, vector<64x128xbf16>, vector<16x128xf32> -> vector<16x128xf32>
    %c1_65 = arith.constant 1 : index
    %c0_66 = arith.constant 0 : index
    %c0_67 = arith.constant 0 : index
    %99 = vector.load %arg11[%c1_65, %c0_66, %c0_67] : memref<2x1x128xf32, #tpu.memory_space<vmem>>, vector<1x1x128xf32>
    %100 = vector.shape_cast %99 : vector<1x1x128xf32> to vector<1x128xf32>
    %101 = vector.broadcast %100 : vector<1x128xf32> to vector<16x128xf32>
    %102 = arith.addf %98, %101 : vector<16x128xf32>
    %103 = vector.extract_strided_slice %102 {offsets = [0, 64], sizes = [16, 64], strides = [1, 1]} : vector<16x128xf32> to vector<16x64xf32>
    %104 = arith.addf %60, %103 : vector<16x64xf32>
    %105 = arith.mulf %104, %4 : vector<16x64xf32>
    %106 = vector.extract_strided_slice %105 {offsets = [0, 0], sizes = [16, 32], strides = [1, 1]} : vector<16x64xf32> to vector<16x32xf32>
    %107 = vector.extract_strided_slice %105 {offsets = [0, 32], sizes = [16, 32], strides = [1, 1]} : vector<16x64xf32> to vector<16x32xf32>
    %108 = arith.addf %106, %107 : vector<16x32xf32>
    %c2_i32_68 = arith.constant 2 : i32
    %109 = tpu.dynamic_rotate %108 by %c2_i32_68 dim 0 : vector<16x32xf32>, i32 -> vector<16x32xf32>
    %c0_69 = arith.constant 0 : index
    %c0_70 = arith.constant 0 : index
    %c0_71 = arith.constant 0 : index
    %c0_72 = arith.constant 0 : index
    %110 = vector.load %arg5[%c0_69, %c0_70, %c0_71, %c0_72] : memref<2x5x16x32xf32, #tpu.memory_space<vmem>>, vector<1x1x16x32xf32>
    %111 = vector.shape_cast %110 : vector<1x1x16x32xf32> to vector<16x32xf32>
    %112 = arith.mulf %109, %111 : vector<16x32xf32>
    %c1_i32_73 = arith.constant 1 : i32
    %113 = tpu.dynamic_rotate %108 by %c1_i32_73 dim 0 : vector<16x32xf32>, i32 -> vector<16x32xf32>
    %c0_74 = arith.constant 0 : index
    %c1_75 = arith.constant 1 : index
    %c0_76 = arith.constant 0 : index
    %c0_77 = arith.constant 0 : index
    %114 = vector.load %arg5[%c0_74, %c1_75, %c0_76, %c0_77] : memref<2x5x16x32xf32, #tpu.memory_space<vmem>>, vector<1x1x16x32xf32>
    %115 = vector.shape_cast %114 : vector<1x1x16x32xf32> to vector<16x32xf32>
    %116 = arith.mulf %113, %115 : vector<16x32xf32>
    %c15_i32_78 = arith.constant 15 : i32
    %117 = tpu.dynamic_rotate %108 by %c15_i32_78 dim 0 : vector<16x32xf32>, i32 -> vector<16x32xf32>
    %c0_79 = arith.constant 0 : index
    %c3_80 = arith.constant 3 : index
    %c0_81 = arith.constant 0 : index
    %c0_82 = arith.constant 0 : index
    %118 = vector.load %arg5[%c0_79, %c3_80, %c0_81, %c0_82] : memref<2x5x16x32xf32, #tpu.memory_space<vmem>>, vector<1x1x16x32xf32>
    %119 = vector.shape_cast %118 : vector<1x1x16x32xf32> to vector<16x32xf32>
    %120 = arith.mulf %117, %119 : vector<16x32xf32>
    %c14_i32_83 = arith.constant 14 : i32
    %121 = tpu.dynamic_rotate %108 by %c14_i32_83 dim 0 : vector<16x32xf32>, i32 -> vector<16x32xf32>
    %c0_84 = arith.constant 0 : index
    %c4_85 = arith.constant 4 : index
    %c0_86 = arith.constant 0 : index
    %c0_87 = arith.constant 0 : index
    %122 = vector.load %arg5[%c0_84, %c4_85, %c0_86, %c0_87] : memref<2x5x16x32xf32, #tpu.memory_space<vmem>>, vector<1x1x16x32xf32>
    %123 = vector.shape_cast %122 : vector<1x1x16x32xf32> to vector<16x32xf32>
    %124 = arith.mulf %121, %123 : vector<16x32xf32>
    %125 = tpu.concatenate %112, %116, %108, %120, %124 in 1 : vector<16x32xf32>, vector<16x32xf32>, vector<16x32xf32>, vector<16x32xf32>, vector<16x32xf32> -> vector<16x160xf32>
    %126 = arith.truncf %125 : vector<16x160xf32> to vector<16x160xbf16>
    %c0_88 = arith.constant 0 : index
    %c0_89 = arith.constant 0 : index
    %c0_90 = arith.constant 0 : index
    %127 = vector.load %arg12[%c0_88, %c0_89, %c0_90] : memref<2x160x64xbf16, #tpu.memory_space<vmem>>, vector<1x160x64xbf16>
    %128 = vector.shape_cast %127 : vector<1x160x64xbf16> to vector<160x64xbf16>
    %cst_91 = arith.constant dense<0.000000e+00> : vector<16x64xf32>
    %129 = tpu.matmul %126, %128, %cst_91 {dimension_numbers = #tpu.dot_dimension_numbers<[1], [0], [0], [1], [0, 0, 1, 1], [], []>} : vector<16x160xbf16>, vector<160x64xbf16>, vector<16x64xf32> -> vector<16x64xf32>
    %c0_92 = arith.constant 0 : index
    %c0_93 = arith.constant 0 : index
    %c0_94 = arith.constant 0 : index
    %130 = vector.load %arg13[%c0_92, %c0_93, %c0_94] : memref<2x1x64xf32, #tpu.memory_space<vmem>>, vector<1x1x64xf32>
    %131 = vector.shape_cast %130 : vector<1x1x64xf32> to vector<1x64xf32>
    %132 = vector.broadcast %131 : vector<1x64xf32> to vector<16x64xf32>
    %133 = arith.addf %129, %132 : vector<16x64xf32>
    %134 = vector.extract_strided_slice %133 {offsets = [0, 0], sizes = [16, 32], strides = [1, 1]} : vector<16x64xf32> to vector<16x32xf32>
    %135 = math.tanh %134 : vector<16x32xf32>
    %136 = vector.extract_strided_slice %133 {offsets = [0, 32], sizes = [16, 32], strides = [1, 1]} : vector<16x64xf32> to vector<16x32xf32>
    %137 = arith.negf %136 : vector<16x32xf32>
    %138 = math.exp %137 : vector<16x32xf32>
    %cst_95 = arith.constant 1.000000e+00 : f32
    %139 = vector.broadcast %cst_95 : f32 to vector<16x32xf32>
    %140 = arith.addf %139, %138 : vector<16x32xf32>
    %141 = arith.divf %139, %140 : vector<16x32xf32>
    %142 = arith.mulf %135, %141 : vector<16x32xf32>
    %143 = arith.truncf %142 : vector<16x32xf32> to vector<16x32xbf16>
    %c0_96 = arith.constant 0 : index
    %c0_97 = arith.constant 0 : index
    %c0_98 = arith.constant 0 : index
    %144 = vector.load %arg14[%c0_96, %c0_97, %c0_98] : memref<2x32x64xbf16, #tpu.memory_space<vmem>>, vector<1x32x64xbf16>
    %145 = vector.shape_cast %144 : vector<1x32x64xbf16> to vector<32x64xbf16>
    %cst_99 = arith.constant dense<0.000000e+00> : vector<16x64xf32>
    %146 = tpu.matmul %143, %145, %cst_99 {dimension_numbers = #tpu.dot_dimension_numbers<[1], [0], [0], [1], [0, 0, 1, 1], [], []>} : vector<16x32xbf16>, vector<32x64xbf16>, vector<16x64xf32> -> vector<16x64xf32>
    %c0_100 = arith.constant 0 : index
    %c0_101 = arith.constant 0 : index
    %c0_102 = arith.constant 0 : index
    %147 = vector.load %arg15[%c0_100, %c0_101, %c0_102] : memref<2x1x64xf32, #tpu.memory_space<vmem>>, vector<1x1x64xf32>
    %148 = vector.shape_cast %147 : vector<1x1x64xf32> to vector<1x64xf32>
    %149 = vector.broadcast %148 : vector<1x64xf32> to vector<16x64xf32>
    %150 = arith.addf %146, %149 : vector<16x64xf32>
    %151 = vector.extract_strided_slice %150 {offsets = [0, 0], sizes = [16, 32], strides = [1, 1]} : vector<16x64xf32> to vector<16x32xf32>
    %152 = arith.addf %108, %151 : vector<16x32xf32>
    %153 = arith.mulf %152, %2 : vector<16x32xf32>
    %154 = vector.extract_strided_slice %150 {offsets = [0, 32], sizes = [16, 32], strides = [1, 1]} : vector<16x64xf32> to vector<16x32xf32>
    %c4_i32_103 = arith.constant 4 : i32
    %155 = tpu.dynamic_rotate %153 by %c4_i32_103 dim 0 : vector<16x32xf32>, i32 -> vector<16x32xf32>
    %c1_104 = arith.constant 1 : index
    %c0_105 = arith.constant 0 : index
    %c0_106 = arith.constant 0 : index
    %c0_107 = arith.constant 0 : index
    %156 = vector.load %arg5[%c1_104, %c0_105, %c0_106, %c0_107] : memref<2x5x16x32xf32, #tpu.memory_space<vmem>>, vector<1x1x16x32xf32>
    %157 = vector.shape_cast %156 : vector<1x1x16x32xf32> to vector<16x32xf32>
    %158 = arith.mulf %155, %157 : vector<16x32xf32>
    %c2_i32_108 = arith.constant 2 : i32
    %159 = tpu.dynamic_rotate %153 by %c2_i32_108 dim 0 : vector<16x32xf32>, i32 -> vector<16x32xf32>
    %c1_109 = arith.constant 1 : index
    %c1_110 = arith.constant 1 : index
    %c0_111 = arith.constant 0 : index
    %c0_112 = arith.constant 0 : index
    %160 = vector.load %arg5[%c1_109, %c1_110, %c0_111, %c0_112] : memref<2x5x16x32xf32, #tpu.memory_space<vmem>>, vector<1x1x16x32xf32>
    %161 = vector.shape_cast %160 : vector<1x1x16x32xf32> to vector<16x32xf32>
    %162 = arith.mulf %159, %161 : vector<16x32xf32>
    %c14_i32_113 = arith.constant 14 : i32
    %163 = tpu.dynamic_rotate %153 by %c14_i32_113 dim 0 : vector<16x32xf32>, i32 -> vector<16x32xf32>
    %c1_114 = arith.constant 1 : index
    %c3_115 = arith.constant 3 : index
    %c0_116 = arith.constant 0 : index
    %c0_117 = arith.constant 0 : index
    %164 = vector.load %arg5[%c1_114, %c3_115, %c0_116, %c0_117] : memref<2x5x16x32xf32, #tpu.memory_space<vmem>>, vector<1x1x16x32xf32>
    %165 = vector.shape_cast %164 : vector<1x1x16x32xf32> to vector<16x32xf32>
    %166 = arith.mulf %163, %165 : vector<16x32xf32>
    %c12_i32_118 = arith.constant 12 : i32
    %167 = tpu.dynamic_rotate %153 by %c12_i32_118 dim 0 : vector<16x32xf32>, i32 -> vector<16x32xf32>
    %c1_119 = arith.constant 1 : index
    %c4_120 = arith.constant 4 : index
    %c0_121 = arith.constant 0 : index
    %c0_122 = arith.constant 0 : index
    %168 = vector.load %arg5[%c1_119, %c4_120, %c0_121, %c0_122] : memref<2x5x16x32xf32, #tpu.memory_space<vmem>>, vector<1x1x16x32xf32>
    %169 = vector.shape_cast %168 : vector<1x1x16x32xf32> to vector<16x32xf32>
    %170 = arith.mulf %167, %169 : vector<16x32xf32>
    %171 = tpu.concatenate %158, %162, %153, %166, %170 in 1 : vector<16x32xf32>, vector<16x32xf32>, vector<16x32xf32>, vector<16x32xf32>, vector<16x32xf32> -> vector<16x160xf32>
    %172 = arith.truncf %171 : vector<16x160xf32> to vector<16x160xbf16>
    %c1_123 = arith.constant 1 : index
    %c0_124 = arith.constant 0 : index
    %c0_125 = arith.constant 0 : index
    %173 = vector.load %arg12[%c1_123, %c0_124, %c0_125] : memref<2x160x64xbf16, #tpu.memory_space<vmem>>, vector<1x160x64xbf16>
    %174 = vector.shape_cast %173 : vector<1x160x64xbf16> to vector<160x64xbf16>
    %cst_126 = arith.constant dense<0.000000e+00> : vector<16x64xf32>
    %175 = tpu.matmul %172, %174, %cst_126 {dimension_numbers = #tpu.dot_dimension_numbers<[1], [0], [0], [1], [0, 0, 1, 1], [], []>} : vector<16x160xbf16>, vector<160x64xbf16>, vector<16x64xf32> -> vector<16x64xf32>
    %c1_127 = arith.constant 1 : index
    %c0_128 = arith.constant 0 : index
    %c0_129 = arith.constant 0 : index
    %176 = vector.load %arg13[%c1_127, %c0_128, %c0_129] : memref<2x1x64xf32, #tpu.memory_space<vmem>>, vector<1x1x64xf32>
    %177 = vector.shape_cast %176 : vector<1x1x64xf32> to vector<1x64xf32>
    %178 = vector.broadcast %177 : vector<1x64xf32> to vector<16x64xf32>
    %179 = arith.addf %175, %178 : vector<16x64xf32>
    %180 = vector.extract_strided_slice %179 {offsets = [0, 0], sizes = [16, 32], strides = [1, 1]} : vector<16x64xf32> to vector<16x32xf32>
    %181 = math.tanh %180 : vector<16x32xf32>
    %182 = vector.extract_strided_slice %179 {offsets = [0, 32], sizes = [16, 32], strides = [1, 1]} : vector<16x64xf32> to vector<16x32xf32>
    %183 = arith.negf %182 : vector<16x32xf32>
    %184 = math.exp %183 : vector<16x32xf32>
    %cst_130 = arith.constant 1.000000e+00 : f32
    %185 = vector.broadcast %cst_130 : f32 to vector<16x32xf32>
    %186 = arith.addf %185, %184 : vector<16x32xf32>
    %187 = arith.divf %185, %186 : vector<16x32xf32>
    %188 = arith.mulf %181, %187 : vector<16x32xf32>
    %189 = arith.truncf %188 : vector<16x32xf32> to vector<16x32xbf16>
    %c1_131 = arith.constant 1 : index
    %c0_132 = arith.constant 0 : index
    %c0_133 = arith.constant 0 : index
    %190 = vector.load %arg14[%c1_131, %c0_132, %c0_133] : memref<2x32x64xbf16, #tpu.memory_space<vmem>>, vector<1x32x64xbf16>
    %191 = vector.shape_cast %190 : vector<1x32x64xbf16> to vector<32x64xbf16>
    %cst_134 = arith.constant dense<0.000000e+00> : vector<16x64xf32>
    %192 = tpu.matmul %189, %191, %cst_134 {dimension_numbers = #tpu.dot_dimension_numbers<[1], [0], [0], [1], [0, 0, 1, 1], [], []>} : vector<16x32xbf16>, vector<32x64xbf16>, vector<16x64xf32> -> vector<16x64xf32>
    %c1_135 = arith.constant 1 : index
    %c0_136 = arith.constant 0 : index
    %c0_137 = arith.constant 0 : index
    %193 = vector.load %arg15[%c1_135, %c0_136, %c0_137] : memref<2x1x64xf32, #tpu.memory_space<vmem>>, vector<1x1x64xf32>
    %194 = vector.shape_cast %193 : vector<1x1x64xf32> to vector<1x64xf32>
    %195 = vector.broadcast %194 : vector<1x64xf32> to vector<16x64xf32>
    %196 = arith.addf %192, %195 : vector<16x64xf32>
    %197 = vector.extract_strided_slice %196 {offsets = [0, 32], sizes = [16, 32], strides = [1, 1]} : vector<16x64xf32> to vector<16x32xf32>
    %198 = arith.addf %154, %197 : vector<16x32xf32>
    %199 = arith.mulf %198, %2 : vector<16x32xf32>
    %200 = arith.truncf %199 : vector<16x32xf32> to vector<16x32xbf16>
    %c0_138 = arith.constant 0 : index
    %c0_139 = arith.constant 0 : index
    %201 = vector.load %arg16[%c0_138, %c0_139] : memref<32x8xbf16, #tpu.memory_space<vmem>>, vector<32x8xbf16>
    %cst_140 = arith.constant dense<0.000000e+00> : vector<16x8xf32>
    %202 = tpu.matmul %200, %201, %cst_140 {dimension_numbers = #tpu.dot_dimension_numbers<[1], [0], [0], [1], [0, 0, 1, 1], [], []>} : vector<16x32xbf16>, vector<32x8xbf16>, vector<16x8xf32> -> vector<16x8xf32>
    %c0_141 = arith.constant 0 : index
    %c0_142 = arith.constant 0 : index
    %203 = vector.load %arg17[%c0_141, %c0_142] : memref<1x8xf32, #tpu.memory_space<vmem>>, vector<1x8xf32>
    %204 = vector.broadcast %203 : vector<1x8xf32> to vector<16x8xf32>
    %205 = arith.addf %202, %204 : vector<16x8xf32>
    %206 = arith.mulf %205, %6 : vector<16x8xf32>
    %207 = vector.extract_strided_slice %206 {offsets = [0, 0], sizes = [16, 4], strides = [1, 1]} : vector<16x8xf32> to vector<16x4xf32>
    %208 = vector.extract_strided_slice %206 {offsets = [0, 4], sizes = [16, 4], strides = [1, 1]} : vector<16x8xf32> to vector<16x4xf32>
    %c0_143 = arith.constant 0 : index
    %c0_144 = arith.constant 0 : index
    %209 = vector.load %arg3[%c0_143, %c0_144] : memref<16x4xf32, #tpu.memory_space<vmem>>, vector<16x4xf32>
    %210 = math.exp %208 : vector<16x4xf32>
    %211 = arith.mulf %209, %210 : vector<16x4xf32>
    %212 = arith.addf %207, %211 : vector<16x4xf32>
    %213 = vector.broadcast %0 : vector<16x1xf32> to vector<16x4xf32>
    %214 = arith.mulf %212, %213 : vector<16x4xf32>
    %215 = tpu.concatenate %214, %207, %208 in 1 : vector<16x4xf32>, vector<16x4xf32>, vector<16x4xf32> -> vector<16x12xf32>
    %c0_145 = arith.constant 0 : index
    %c0_146 = arith.constant 0 : index
    %216 = vector.load %arg18[%c0_145, %c0_146] : memref<16x12xf32, #tpu.memory_space<vmem>>, vector<16x12xf32>
    tpu.vector_store %arg18[%c0_145, %c0_146], %215 {strides = array<i32>} : memref<16x12xf32, #tpu.memory_space<vmem>>, vector<16x12xf32>,
    return
  }
  func.func @transform_0(%arg0: i32) -> (i32, i32) {
    %c0_i32 = arith.constant 0 : i32
    %c0_i32_0 = arith.constant 0 : i32
    %c0_i32_1 = arith.constant 0 : i32
    return %c0_i32, %c0_i32_0 : i32, i32
  }
  func.func @transform_1(%arg0: i32) -> (i32, i32) {
    %c0_i32 = arith.constant 0 : i32
    %c0_i32_0 = arith.constant 0 : i32
    %c0_i32_1 = arith.constant 0 : i32
    return %c0_i32, %c0_i32_0 : i32, i32
  }
  func.func @transform_2(%arg0: i32) -> (i32, i32) {
    %c0_i32 = arith.constant 0 : i32
    %c0_i32_0 = arith.constant 0 : i32
    %c0_i32_1 = arith.constant 0 : i32
    return %c0_i32, %c0_i32_0 : i32, i32
  }
  func.func @transform_3(%arg0: i32) -> (i32, i32, i32, i32) {
    %c0_i32 = arith.constant 0 : i32
    %c0_i32_0 = arith.constant 0 : i32
    %c0_i32_1 = arith.constant 0 : i32
    %c0_i32_2 = arith.constant 0 : i32
    %c0_i32_3 = arith.constant 0 : i32
    return %c0_i32, %c0_i32_0, %c0_i32_1, %c0_i32_2 : i32, i32, i32, i32
  }
  func.func @transform_4(%arg0: i32) -> (i32, i32, i32, i32) {
    %c0_i32 = arith.constant 0 : i32
    %c0_i32_0 = arith.constant 0 : i32
    %c0_i32_1 = arith.constant 0 : i32
    %c0_i32_2 = arith.constant 0 : i32
    %c0_i32_3 = arith.constant 0 : i32
    return %c0_i32, %c0_i32_0, %c0_i32_1, %c0_i32_2 : i32, i32, i32, i32
  }
  func.func @transform_5(%arg0: i32) -> (i32, i32) {
    %c0_i32 = arith.constant 0 : i32
    %c0_i32_0 = arith.constant 0 : i32
    %c0_i32_1 = arith.constant 0 : i32
    return %c0_i32, %c0_i32_0 : i32, i32
  }
  func.func @transform_6(%arg0: i32) -> (i32, i32) {
    %c0_i32 = arith.constant 0 : i32
    %c0_i32_0 = arith.constant 0 : i32
    %c0_i32_1 = arith.constant 0 : i32
    return %c0_i32, %c0_i32_0 : i32, i32
  }
  func.func @transform_7(%arg0: i32) -> (i32, i32, i32) {
    %c0_i32 = arith.constant 0 : i32
    %c0_i32_0 = arith.constant 0 : i32
    %c0_i32_1 = arith.constant 0 : i32
    %c0_i32_2 = arith.constant 0 : i32
    return %c0_i32, %c0_i32_0, %c0_i32_1 : i32, i32, i32
  }
  func.func @transform_8(%arg0: i32) -> (i32, i32, i32) {
    %c0_i32 = arith.constant 0 : i32
    %c0_i32_0 = arith.constant 0 : i32
    %c0_i32_1 = arith.constant 0 : i32
    %c0_i32_2 = arith.constant 0 : i32
    return %c0_i32, %c0_i32_0, %c0_i32_1 : i32, i32, i32
  }
  func.func @transform_9(%arg0: i32) -> (i32, i32, i32) {
    %c0_i32 = arith.constant 0 : i32
    %c0_i32_0 = arith.constant 0 : i32
    %c0_i32_1 = arith.constant 0 : i32
    %c0_i32_2 = arith.constant 0 : i32
    return %c0_i32, %c0_i32_0, %c0_i32_1 : i32, i32, i32
  }
  func.func @transform_10(%arg0: i32) -> (i32, i32, i32) {
    %c0_i32 = arith.constant 0 : i32
    %c0_i32_0 = arith.constant 0 : i32
    %c0_i32_1 = arith.constant 0 : i32
    %c0_i32_2 = arith.constant 0 : i32
    return %c0_i32, %c0_i32_0, %c0_i32_1 : i32, i32, i32
  }
  func.func @transform_11(%arg0: i32) -> (i32, i32, i32) {
    %c0_i32 = arith.constant 0 : i32
    %c0_i32_0 = arith.constant 0 : i32
    %c0_i32_1 = arith.constant 0 : i32
    %c0_i32_2 = arith.constant 0 : i32
    return %c0_i32, %c0_i32_0, %c0_i32_1 : i32, i32, i32
  }
  func.func @transform_12(%arg0: i32) -> (i32, i32, i32) {
    %c0_i32 = arith.constant 0 : i32
    %c0_i32_0 = arith.constant 0 : i32
    %c0_i32_1 = arith.constant 0 : i32
    %c0_i32_2 = arith.constant 0 : i32
    return %c0_i32, %c0_i32_0, %c0_i32_1 : i32, i32, i32
  }
  func.func @transform_13(%arg0: i32) -> (i32, i32, i32) {
    %c0_i32 = arith.constant 0 : i32
    %c0_i32_0 = arith.constant 0 : i32
    %c0_i32_1 = arith.constant 0 : i32
    %c0_i32_2 = arith.constant 0 : i32
    return %c0_i32, %c0_i32_0, %c0_i32_1 : i32, i32, i32
  }
  func.func @transform_14(%arg0: i32) -> (i32, i32, i32) {
    %c0_i32 = arith.constant 0 : i32
    %c0_i32_0 = arith.constant 0 : i32
    %c0_i32_1 = arith.constant 0 : i32
    %c0_i32_2 = arith.constant 0 : i32
    return %c0_i32, %c0_i32_0, %c0_i32_1 : i32, i32, i32
  }
  func.func @transform_15(%arg0: i32) -> (i32, i32) {
    %c0_i32 = arith.constant 0 : i32
    %c0_i32_0 = arith.constant 0 : i32
    %c0_i32_1 = arith.constant 0 : i32
    return %c0_i32, %c0_i32_0 : i32, i32
  }
  func.func @transform_16(%arg0: i32) -> (i32, i32) {
    %c0_i32 = arith.constant 0 : i32
    %c0_i32_0 = arith.constant 0 : i32
    %c0_i32_1 = arith.constant 0 : i32
    return %c0_i32, %c0_i32_0 : i32, i32
  }
  func.func @transform_17(%arg0: i32) -> (i32, i32) {
    %c0_i32 = arith.constant 0 : i32
    %c0_i32_0 = arith.constant 0 : i32
    %c0_i32_1 = arith.constant 0 : i32
    return %c0_i32, %c0_i32_0 : i32, i32
  }
}

</mosaic_0001>

<llo_original>
// kernel: posterior_sf_encoder.1
$region0: #{posterior_sf_encoder.1}
  #allocation0 [shape = 'u32[]', space=smem, size = 0x4, offset = 0x4, fixed_abs, tag = 'smem constant byte address 0x4 - core index']
  #allocation1 [shape = 'u32[72,128]{1,0:T(1,128)}', space=vmem, size = 0x9000, scoped, tag = 'internal scratch']
  %s0 = inlined_call_operand.vmem [shape: f32[16,15], index: 0, kind: input, shape index: {}]
  %s1 = inlined_call_operand.vmem [shape: f32[16,1], index: 1, kind: input, shape index: {}]
  %s2 = inlined_call_operand.vmem [shape: f32[16,4], index: 2, kind: input, shape index: {}]
  %s3 = inlined_call_operand.vmem [shape: f32[2,5,16,64], index: 3, kind: input, shape index: {}]
  %s4 = inlined_call_operand.vmem [shape: f32[2,5,16,32], index: 4, kind: input, shape index: {}]
  %s5 = inlined_call_operand.vmem [shape: bf16[15,64], index: 5, kind: input, shape index: {}]
  %s6 = inlined_call_operand.vmem [shape: f32[1,64], index: 6, kind: input, shape index: {}]
  %s7 = inlined_call_operand.vmem [shape: bf16[2,320,128], index: 7, kind: input, shape index: {}]
  %s8 = inlined_call_operand.vmem [shape: f32[2,1,128], index: 8, kind: input, shape index: {}]
  %s9 = inlined_call_operand.vmem [shape: bf16[2,64,128], index: 9, kind: input, shape index: {}]
  %s10 = inlined_call_operand.vmem [shape: f32[2,1,128], index: 10, kind: input, shape index: {}]
  %s11 = inlined_call_operand.vmem [shape: bf16[2,160,64], index: 11, kind: input, shape index: {}]
  %s12 = inlined_call_operand.vmem [shape: f32[2,1,64], index: 12, kind: input, shape index: {}]
  %s13 = inlined_call_operand.vmem [shape: bf16[2,32,64], index: 13, kind: input, shape index: {}]
  %s14 = inlined_call_operand.vmem [shape: f32[2,1,64], index: 14, kind: input, shape index: {}]
  %s15 = inlined_call_operand.vmem [shape: bf16[32,8], index: 15, kind: input, shape index: {}]
  %s16 = inlined_call_operand.vmem [shape: f32[1,8], index: 16, kind: input, shape index: {}]
  %s17 = inlined_call_operand.vmem [shape: f32[16,12], index: 17, kind: output, shape index: {}]
  %s18 = sld [smem:[#allocation0]]
  $region78: #{posterior_sf_encoder.1} parent=0
    _
  %s20 = ssub.s32 1, %s18
  %s21 = scalar_select 0, %s20, %s18
  // Predicated region
  $region2: #{posterior_sf_encoder.1} parent=0 // pred_check
    _
  $region3: #{posterior_sf_encoder.1} parent=0 // pred_check_branch
    %23 = sbr.rel (0) target = $region5
  $region4: #{posterior_sf_encoder.1} parent=0 // pred_region
    _
  $region5: #{posterior_sf_encoder.1} parent=0 // pred_fallthru
    _
  // Predicated region
  $region6: #{posterior_sf_encoder.1} parent=0 // pred_check
    _
  $region7: #{posterior_sf_encoder.1} parent=0 // pred_check_branch
    %25 = sbr.rel (0) target = $region9
  $region8: #{posterior_sf_encoder.1} parent=0 // pred_region
    _
  $region9: #{posterior_sf_encoder.1} parent=0 // pred_fallthru
    _
  // Predicated region
  $region10: #{posterior_sf_encoder.1} parent=0 // pred_check
    _
  $region11: #{posterior_sf_encoder.1} parent=0 // pred_check_branch
    %27 = sbr.rel (0) target = $region13
  $region12: #{posterior_sf_encoder.1} parent=0 // pred_region
    _
  $region13: #{posterior_sf_encoder.1} parent=0 // pred_fallthru
    _
  // Predicated region
  $region14: #{posterior_sf_encoder.1} parent=0 // pred_check
    _
  $region15: #{posterior_sf_encoder.1} parent=0 // pred_check_branch
    %29 = sbr.rel (0) target = $region17
  $region16: #{posterior_sf_encoder.1} parent=0 // pred_region
    _
  $region17: #{posterior_sf_encoder.1} parent=0 // pred_fallthru
    _
  // Predicated region
  $region18: #{posterior_sf_encoder.1} parent=0 // pred_check
    _
  $region19: #{posterior_sf_encoder.1} parent=0 // pred_check_branch
    %31 = sbr.rel (0) target = $region21
  $region20: #{posterior_sf_encoder.1} parent=0 // pred_region
    _
  $region21: #{posterior_sf_encoder.1} parent=0 // pred_fallthru
    _
  // Predicated region
  $region22: #{posterior_sf_encoder.1} parent=0 // pred_check
    _
  $region23: #{posterior_sf_encoder.1} parent=0 // pred_check_branch
    %33 = sbr.rel (0) target = $region25
  $region24: #{posterior_sf_encoder.1} parent=0 // pred_region
    _
  $region25: #{posterior_sf_encoder.1} parent=0 // pred_fallthru
    _
  // Predicated region
  $region26: #{posterior_sf_encoder.1} parent=0 // pred_check
    _
  $region27: #{posterior_sf_encoder.1} parent=0 // pred_check_branch
    %35 = sbr.rel (0) target = $region29
  $region28: #{posterior_sf_encoder.1} parent=0 // pred_region
    _
  $region29: #{posterior_sf_encoder.1} parent=0 // pred_fallthru
    _
  // Predicated region
  $region30: #{posterior_sf_encoder.1} parent=0 // pred_check
    _
  $region31: #{posterior_sf_encoder.1} parent=0 // pred_check_branch
    %37 = sbr.rel (0) target = $region33
  $region32: #{posterior_sf_encoder.1} parent=0 // pred_region
    _
  $region33: #{posterior_sf_encoder.1} parent=0 // pred_fallthru
    _
  // Predicated region
  $region34: #{posterior_sf_encoder.1} parent=0 // pred_check
    _
  $region35: #{posterior_sf_encoder.1} parent=0 // pred_check_branch
    %39 = sbr.rel (0) target = $region37
  $region36: #{posterior_sf_encoder.1} parent=0 // pred_region
    _
  $region37: #{posterior_sf_encoder.1} parent=0 // pred_fallthru
    _
  // Predicated region
  $region38: #{posterior_sf_encoder.1} parent=0 // pred_check
    _
  $region39: #{posterior_sf_encoder.1} parent=0 // pred_check_branch
    %41 = sbr.rel (0) target = $region41
  $region40: #{posterior_sf_encoder.1} parent=0 // pred_region
    _
  $region41: #{posterior_sf_encoder.1} parent=0 // pred_fallthru
    _
  // Predicated region
  $region42: #{posterior_sf_encoder.1} parent=0 // pred_check
    _
  $region43: #{posterior_sf_encoder.1} parent=0 // pred_check_branch
    %43 = sbr.rel (0) target = $region45
  $region44: #{posterior_sf_encoder.1} parent=0 // pred_region
    _
  $region45: #{posterior_sf_encoder.1} parent=0 // pred_fallthru
    _
  // Predicated region
  $region46: #{posterior_sf_encoder.1} parent=0 // pred_check
    _
  $region47: #{posterior_sf_encoder.1} parent=0 // pred_check_branch
    %45 = sbr.rel (0) target = $region49
  $region48: #{posterior_sf_encoder.1} parent=0 // pred_region
    _
  $region49: #{posterior_sf_encoder.1} parent=0 // pred_fallthru
    _
  // Predicated region
  $region50: #{posterior_sf_encoder.1} parent=0 // pred_check
    _
  $region51: #{posterior_sf_encoder.1} parent=0 // pred_check_branch
    %47 = sbr.rel (0) target = $region53
  $region52: #{posterior_sf_encoder.1} parent=0 // pred_region
    _
  $region53: #{posterior_sf_encoder.1} parent=0 // pred_fallthru
    _
  // Predicated region
  $region54: #{posterior_sf_encoder.1} parent=0 // pred_check
    _
  $region55: #{posterior_sf_encoder.1} parent=0 // pred_check_branch
    %49 = sbr.rel (0) target = $region57
  $region56: #{posterior_sf_encoder.1} parent=0 // pred_region
    _
  $region57: #{posterior_sf_encoder.1} parent=0 // pred_fallthru
    _
  // Predicated region
  $region58: #{posterior_sf_encoder.1} parent=0 // pred_check
    _
  $region59: #{posterior_sf_encoder.1} parent=0 // pred_check_branch
    %51 = sbr.rel (0) target = $region61
  $region60: #{posterior_sf_encoder.1} parent=0 // pred_region
    _
  $region61: #{posterior_sf_encoder.1} parent=0 // pred_fallthru
    _
  // Predicated region
  $region62: #{posterior_sf_encoder.1} parent=0 // pred_check
    _
  $region63: #{posterior_sf_encoder.1} parent=0 // pred_check_branch
    %53 = sbr.rel (0) target = $region65
  $region64: #{posterior_sf_encoder.1} parent=0 // pred_region
    _
  $region65: #{posterior_sf_encoder.1} parent=0 // pred_fallthru
    _
  // Predicated region
  $region66: #{posterior_sf_encoder.1} parent=0 // pred_check
    _
  $region67: #{posterior_sf_encoder.1} parent=0 // pred_check_branch
    %55 = sbr.rel (0) target = $region69
  $region68: #{posterior_sf_encoder.1} parent=0 // pred_region
    _
  $region69: #{posterior_sf_encoder.1} parent=0 // pred_fallthru
    _
  %v57 = vld [vmem:[%s1] sm:$0xff]
  %v58 = vld [vmem:[%s1 + $0x8] sm:$0xff]
  %60 = vset.pattern.permute.xlu0 0
  %61 = vperm.xlu0 %60, %v57
  %v62 = vpop.permute.xlu0 %61
  %65 = vset.pattern.permute.xlu0 0
  %66 = vperm.xlu0 %65, %v58
  %v67 = vpop.permute.xlu0 %66
  %v69 = vld [vmem:[%s0] sm:$0xff]
  %v70 = vld [vmem:[%s0 + $0x8] sm:$0xff]
  %v71 = vpack.c.bf16 %v70, %v69
  %v72 = vld [vmem:[%s5] sm:$0xf]
  %v73 = vld [vmem:[%s5 + $0x4] sm:$0xf]
  %v74 = vld [vmem:[%s6] sm:$0x1]
  %v76 = vperm.slane %v74, 0
  %v80 = vunpack.c.l.b16 %v72
  %v81 = vunpack.c.l.b16 %v73
  %v82 = vpack.c.b16 %v81, %v80
  %vm83 = vcmask 121856
  %v85 = vsel %vm83, %v71, 0
  %vm87 = vcmask 1046528
  %vm88 = vcmask 1047552
  %v89 = vsel %vm87, 4294967295, 65535
  %v90 = vsel %vm88, %v89, 0
  %v92 = vand.u32 %v82, %v90
  %94 = vmatpush.bf16.msra.mxu0 0
  %95 = vmatpush.bf16.msra.mxu0 0
  %96 = vmatpush.bf16.msra.mxu0 0
  %97 = vmatpush.bf16.msra.mxu0 0
  %98 = vmatpush.bf16.msra.mxu0 0
  %99 = vmatpush.bf16.msra.mxu0 0
  %100 = vmatpush.bf16.msra.mxu0 0
  %101 = vmatpush.bf16.msra.mxu0 %v92
  %102 = vmatmul.bf16.gmra.mxu0 %v85
  %v103 = vpop.f32.mrf.mxu0
  %v104 = vadd.f32 %v76, %v103
  %v105 = vpop.f32.mrf.mxu0
  %v106 = vadd.f32 %v76, %v105
  %107 = vdwg.mxu0
  %v108 = vmul.f32 %v104, %v62
  %v109 = vmul.f32 %v106, %v67
  %v110 = vrot.slane %v108, 6
  %v111 = vrot.slane %v109, 6
  %v112 = vlaneseq
  %v113 = vshrl.u32 %v112, 7
  %vm114 = vcmp.lt.s32.totalorder %v113, 2
  %v115 = vsel %vm114, %v110, %v111
  %v116 = vsel %vm114, %v111, %v110
  %v117 = vld [vmem:[%s3] sm:$0xff]
  %v118 = vld [vmem:[%s3 + $0x8] sm:$0xff]
  %v119 = vmul.f32 %v116, %v117
  %v120 = vmul.f32 %v115, %v118
  %v121 = vrot.slane %v108, 7
  %v122 = vrot.slane %v109, 7
  %vm123 = vcmp.lt.s32.totalorder %v113, 1
  %v124 = vsel %vm123, %v121, %v122
  %v125 = vsel %vm123, %v122, %v121
  %s126 = scalar_lea.vmem %s3, 16
  %v127 = vld [vmem:[%s126] sm:$0xff]
  %v128 = vld [vmem:[%s126 + $0x8] sm:$0xff]
  %v129 = vmul.f32 %v125, %v127
  %v130 = vmul.f32 %v124, %v128
  %v131 = vrot.slane %v108, 1
  %v132 = vrot.slane %v109, 1
  %vm133 = vcmp.lt.s32.totalorder %v113, 7
  %v134 = vsel %vm133, %v131, %v132
  %v135 = vsel %vm133, %v132, %v131
  %s136 = scalar_lea.vmem %s3, 48
  %v137 = vld [vmem:[%s136] sm:$0xff]
  %v138 = vld [vmem:[%s136 + $0x8] sm:$0xff]
  %v139 = vmul.f32 %v134, %v137
  %v140 = vmul.f32 %v135, %v138
  %v141 = vrot.slane %v108, 2
  %v142 = vrot.slane %v109, 2
  %vm143 = vcmp.lt.s32.totalorder %v113, 6
  %v144 = vsel %vm143, %v141, %v142
  %v145 = vsel %vm143, %v142, %v141
  %s146 = scalar_lea.vmem %s3, 64
  %v147 = vld [vmem:[%s146] sm:$0xff]
  %v148 = vld [vmem:[%s146 + $0x8] sm:$0xff]
  %v149 = vmul.f32 %v144, %v147
  %v150 = vmul.f32 %v145, %v148
  %153 = vrot.lane.b32.xlu0 %v129, 64
  %v154 = vpop.permute.xlu0 %153
  %155 = vrot.lane.b32.xlu0 %v130, 64
  %v156 = vpop.permute.xlu0 %155
  %161 = vrot.lane.b32.xlu0 %v139, 64
  %v162 = vpop.permute.xlu0 %161
  %163 = vrot.lane.b32.xlu0 %v140, 64
  %v164 = vpop.permute.xlu0 %163
  %vm167 = vcmask 523264
  %v168 = vsel %vm167, %v119, %v154
  %v169 = vsel %vm167, %v120, %v156
  %v170 = vsel %vm167, %v108, %v162
  %v171 = vsel %vm167, %v109, %v164
  %v172 = vpack.c.bf16 %v169, %v168
  %v173 = vpack.c.bf16 %v171, %v170
  %v174 = vpack.c.bf16 %v150, %v149
  %v175 = vld [vmem:[%s7] sm:$0xf]
  %v176 = vld [vmem:[%s7 + $0x4] sm:$0xf]
  %v177 = vld [vmem:[%s7 + $0x8] sm:$0xf]
  %v178 = vld [vmem:[%s7 + $0xc] sm:$0xf]
  %v179 = vld [vmem:[%s7 + $0x10] sm:$0xf]
  %v180 = vld [vmem:[%s7 + $0x14] sm:$0xf]
  %v181 = vld [vmem:[%s7 + $0x18] sm:$0xf]
  %v182 = vld [vmem:[%s7 + $0x1c] sm:$0xf]
  %v183 = vld [vmem:[%s7 + $0x20] sm:$0xf]
  %v184 = vld [vmem:[%s7 + $0x24] sm:$0xf]
  %v185 = vld [vmem:[%s7 + $0x28] sm:$0xf]
  %v186 = vld [vmem:[%s7 + $0x2c] sm:$0xf]
  %v187 = vld [vmem:[%s7 + $0x30] sm:$0xf]
  %v188 = vld [vmem:[%s7 + $0x34] sm:$0xf]
  %v189 = vld [vmem:[%s7 + $0x38] sm:$0xf]
  %v190 = vld [vmem:[%s7 + $0x3c] sm:$0xf]
  %v191 = vld [vmem:[%s7 + $0x40] sm:$0xf]
  %v192 = vld [vmem:[%s7 + $0x44] sm:$0xf]
  %v193 = vld [vmem:[%s7 + $0x48] sm:$0xf]
  %v194 = vld [vmem:[%s7 + $0x4c] sm:$0xf]
  %v195 = vld [vmem:[%s7 + $0x50] sm:$0xf]
  %v196 = vld [vmem:[%s7 + $0x54] sm:$0xf]
  %v197 = vld [vmem:[%s7 + $0x58] sm:$0xf]
  %v198 = vld [vmem:[%s7 + $0x5c] sm:$0xf]
  %v199 = vld [vmem:[%s7 + $0x60] sm:$0xf]
  %v200 = vld [vmem:[%s7 + $0x64] sm:$0xf]
  %v201 = vld [vmem:[%s7 + $0x68] sm:$0xf]
  %v202 = vld [vmem:[%s7 + $0x6c] sm:$0xf]
  %v203 = vld [vmem:[%s7 + $0x70] sm:$0xf]
  %v204 = vld [vmem:[%s7 + $0x74] sm:$0xf]
  %v205 = vld [vmem:[%s7 + $0x78] sm:$0xf]
  %v206 = vld [vmem:[%s7 + $0x7c] sm:$0xf]
  %v207 = vld [vmem:[%s7 + $0x80] sm:$0xf]
  %v208 = vld [vmem:[%s7 + $0x84] sm:$0xf]
  %v209 = vld [vmem:[%s7 + $0x88] sm:$0xf]
  %v210 = vld [vmem:[%s7 + $0x8c] sm:$0xf]
  %v211 = vld [vmem:[%s7 + $0x90] sm:$0xf]
  %v212 = vld [vmem:[%s7 + $0x94] sm:$0xf]
  %v213 = vld [vmem:[%s7 + $0x98] sm:$0xf]
  %v214 = vld [vmem:[%s7 + $0x9c] sm:$0xf]
  %v215 = vld [vmem:[%s8] sm:$0x1]
  %v217 = vperm.slane %v215, 0
  %v259 = vunpack.c.l.b16 %v175
  %v260 = vunpack.c.l.b16 %v176
  %v261 = vunpack.c.l.b16 %v177
  %v262 = vunpack.c.l.b16 %v178
  %v263 = vunpack.c.l.b16 %v179
  %v264 = vunpack.c.l.b16 %v180
  %v265 = vunpack.c.l.b16 %v181
  %v266 = vunpack.c.l.b16 %v182
  %v267 = vunpack.c.l.b16 %v183
  %v268 = vunpack.c.l.b16 %v184
  %v269 = vunpack.c.l.b16 %v185
  %v270 = vunpack.c.l.b16 %v186
  %v271 = vunpack.c.l.b16 %v187
  %v272 = vunpack.c.l.b16 %v188
  %v273 = vunpack.c.l.b16 %v189
  %v274 = vunpack.c.l.b16 %v190
  %v275 = vunpack.c.l.b16 %v191
  %v276 = vunpack.c.l.b16 %v192
  %v277 = vunpack.c.l.b16 %v193
  %v278 = vunpack.c.l.b16 %v194
  %v279 = vunpack.c.l.b16 %v195
  %v280 = vunpack.c.l.b16 %v196
  %v281 = vunpack.c.l.b16 %v197
  %v282 = vunpack.c.l.b16 %v198
  %v283 = vunpack.c.l.b16 %v199
  %v284 = vunpack.c.l.b16 %v200
  %v285 = vunpack.c.l.b16 %v201
  %v286 = vunpack.c.l.b16 %v202
  %v287 = vunpack.c.l.b16 %v203
  %v288 = vunpack.c.l.b16 %v204
  %v289 = vunpack.c.l.b16 %v205
  %v290 = vunpack.c.l.b16 %v206
  %v291 = vunpack.c.l.b16 %v207
  %v292 = vunpack.c.l.b16 %v208
  %v293 = vunpack.c.l.b16 %v209
  %v294 = vunpack.c.l.b16 %v210
  %v295 = vunpack.c.l.b16 %v211
  %v296 = vunpack.c.l.b16 %v212
  %v297 = vunpack.c.l.b16 %v213
  %v298 = vunpack.c.l.b16 %v214
  %v299 = vpack.c.b16 %v260, %v259
  %v300 = vpack.c.b16 %v262, %v261
  %v301 = vpack.c.b16 %v264, %v263
  %v302 = vpack.c.b16 %v266, %v265
  %v303 = vpack.c.b16 %v268, %v267
  %v304 = vpack.c.b16 %v270, %v269
  %v305 = vpack.c.b16 %v272, %v271
  %v306 = vpack.c.b16 %v274, %v273
  %v307 = vpack.c.b16 %v276, %v275
  %v308 = vpack.c.b16 %v278, %v277
  %v309 = vpack.c.b16 %v280, %v279
  %v310 = vpack.c.b16 %v282, %v281
  %v311 = vpack.c.b16 %v284, %v283
  %v312 = vpack.c.b16 %v286, %v285
  %v313 = vpack.c.b16 %v288, %v287
  %v314 = vpack.c.b16 %v290, %v289
  %v315 = vpack.c.b16 %v292, %v291
  %v316 = vpack.c.b16 %v294, %v293
  %v317 = vpack.c.b16 %v296, %v295
  %v318 = vpack.c.b16 %v298, %v297
  %v340 = vsel %vm167, %v174, 0
  %342 = vmatpush.bf16.msra.mxu0 %v306
  %343 = vmatpush.bf16.msra.mxu0 %v305
  %344 = vmatpush.bf16.msra.mxu0 %v304
  %345 = vmatpush.bf16.msra.mxu0 %v303
  %346 = vmatpush.bf16.msra.mxu0 %v302
  %347 = vmatpush.bf16.msra.mxu0 %v301
  %348 = vmatpush.bf16.msra.mxu0 %v300
  %349 = vmatpush.bf16.msra.mxu0 %v299
  %350 = vmatmul.bf16.gmra.mxu0 %v172
  %v351 = vpop.f32.mrf.mxu0
  %v352 = vadd.f32 %v217, %v351
  %v353 = vpop.f32.mrf.mxu0
  %v354 = vadd.f32 %v217, %v353
  %355 = vdwg.mxu0
  %356 = vmatpush.bf16.msra.mxu0 %v314
  %357 = vmatpush.bf16.msra.mxu0 %v313
  %358 = vmatpush.bf16.msra.mxu0 %v312
  %359 = vmatpush.bf16.msra.mxu0 %v311
  %360 = vmatpush.bf16.msra.mxu0 %v310
  %361 = vmatpush.bf16.msra.mxu0 %v309
  %362 = vmatpush.bf16.msra.mxu0 %v308
  %363 = vmatpush.bf16.msra.mxu0 %v307
  %364 = vmatmul.bf16.gmra.mxu0 %v173
  %v365 = vpop.f32.mrf.mxu0
  %v366 = vadd.f32 %v352, %v365
  %v367 = vpop.f32.mrf.mxu0
  %v368 = vadd.f32 %v354, %v367
  %369 = vdwg.mxu0
  %370 = vmatpush.bf16.msra.mxu0 0
  %371 = vmatpush.bf16.msra.mxu0 0
  %372 = vmatpush.bf16.msra.mxu0 0
  %373 = vmatpush.bf16.msra.mxu0 0
  %374 = vmatpush.bf16.msra.mxu0 %v318
  %375 = vmatpush.bf16.msra.mxu0 %v317
  %376 = vmatpush.bf16.msra.mxu0 %v316
  %377 = vmatpush.bf16.msra.mxu0 %v315
  %378 = vmatmul.bf16.gmra.mxu0 %v340
  %v379 = vpop.f32.mrf.mxu0
  %v380 = vadd.f32 %v366, %v379
  %v381 = vpop.f32.mrf.mxu0
  %v382 = vadd.f32 %v368, %v381
  %383 = vdwg.mxu0
  %v384 = vtanh.pop %v380
  %v385 = vtanh.pop %v382
  %v386 = vxor.u32 %v380, 2147483648
  %v387 = vxor.u32 %v382, 2147483648
  %v388 = vmul.f32 %v386, 1.442695
  %v389 = vpow.pop %v388
  %v390 = vmul.f32 %v387, 1.442695
  %v391 = vpow.pop %v390
  %v392 = vadd.f32 %v389, 1.0
  %v393 = vadd.f32 %v391, 1.0
  %v394 = vrcp.pop %v392
  %v395 = vmul.f32 %v392, %v394
  %v396 = vsub.f32 1.0, %v395
  %v397 = vmul.f32 %v394, %v396
  %v398 = vadd.f32 %v394, %v397
  %vm399 = vweird.f32 %v392
  %vm400 = vweird.f32 %v394
  %vm401 = vmor %vm399, %vm400
  %v402 = vsel %vm401, %v394, %v398
  %v403 = vand.u32 2147483647, %v392
  %vm404 = vcmp.eq.f32.partialorder %v403, 8.507059e+37
  %v405 = vand.u32 %v392, 2147483648
  %v406 = vor.u32 1.1754944e-38, %v405
  %v407 = vsel %vm404, %v406, %v402
  %v408 = vmul.f32 1.0, %v407
  %v409 = vrcp.pop %v393
  %v410 = vmul.f32 %v393, %v409
  %v411 = vsub.f32 1.0, %v410
  %v412 = vmul.f32 %v409, %v411
  %v413 = vadd.f32 %v409, %v412
  %vm414 = vweird.f32 %v393
  %vm415 = vweird.f32 %v409
  %vm416 = vmor %vm414, %vm415
  %v417 = vsel %vm416, %v409, %v413
  %v418 = vand.u32 2147483647, %v393
  %vm419 = vcmp.eq.f32.partialorder %v418, 8.507059e+37
  %v420 = vand.u32 %v393, 2147483648
  %v421 = vor.u32 1.1754944e-38, %v420
  %v422 = vsel %vm419, %v421, %v417
  %v423 = vmul.f32 1.0, %v422
  %426 = vrot.lane.b32.xlu0 %v408, 64
  %v427 = vpop.permute.xlu0 %426
  %428 = vrot.lane.b32.xlu0 %v423, 64
  %v429 = vpop.permute.xlu0 %428
  %v432 = vmul.f32 %v384, %v427
  %v433 = vmul.f32 %v385, %v429
  %v434 = vpack.c.bf16 %v433, %v432
  %v435 = vld [vmem:[%s9] sm:$0xf]
  %v436 = vld [vmem:[%s9 + $0x4] sm:$0xf]
  %v437 = vld [vmem:[%s9 + $0x8] sm:$0xf]
  %v438 = vld [vmem:[%s9 + $0xc] sm:$0xf]
  %v439 = vld [vmem:[%s9 + $0x10] sm:$0xf]
  %v440 = vld [vmem:[%s9 + $0x14] sm:$0xf]
  %v441 = vld [vmem:[%s9 + $0x18] sm:$0xf]
  %v442 = vld [vmem:[%s9 + $0x1c] sm:$0xf]
  %v443 = vld [vmem:[%s10] sm:$0x1]
  %v445 = vperm.slane %v443, 0
  %v455 = vunpack.c.l.b16 %v435
  %v456 = vunpack.c.l.b16 %v436
  %v457 = vunpack.c.l.b16 %v437
  %v458 = vunpack.c.l.b16 %v438
  %v459 = vunpack.c.l.b16 %v439
  %v460 = vunpack.c.l.b16 %v440
  %v461 = vunpack.c.l.b16 %v441
  %v462 = vunpack.c.l.b16 %v442
  %v463 = vpack.c.b16 %v456, %v455
  %v464 = vpack.c.b16 %v458, %v457
  %v465 = vpack.c.b16 %v460, %v459
  %v466 = vpack.c.b16 %v462, %v461
  %v472 = vsel %vm167, %v434, 0
  %474 = vmatpush.bf16.msra.mxu0 0
  %475 = vmatpush.bf16.msra.mxu0 0
  %476 = vmatpush.bf16.msra.mxu0 0
  %477 = vmatpush.bf16.msra.mxu0 0
  %478 = vmatpush.bf16.msra.mxu0 %v466
  %479 = vmatpush.bf16.msra.mxu0 %v465
  %480 = vmatpush.bf16.msra.mxu0 %v464
  %481 = vmatpush.bf16.msra.mxu0 %v463
  %482 = vmatmul.bf16.gmra.mxu0 %v472
  %v483 = vpop.f32.mrf.mxu0
  %v484 = vadd.f32 %v445, %v483
  %v485 = vpop.f32.mrf.mxu0
  %v486 = vadd.f32 %v445, %v485
  %487 = vdwg.mxu0
  %v488 = vadd.f32 %v108, %v484
  %v489 = vadd.f32 %v109, %v486
  %v490 = vmul.f32 %v488, %v62
  %v491 = vmul.f32 %v489, %v67
  %v492 = vrot.slane %v490, 4
  %v493 = vrot.slane %v491, 4
  %vm494 = vcmp.lt.s32.totalorder %v113, 4
  %v495 = vsel %vm494, %v492, %v493
  %v496 = vsel %vm494, %v493, %v492
  %s497 = scalar_lea.vmem %s3, 80
  %v498 = vld [vmem:[%s497] sm:$0xff]
  %v499 = vld [vmem:[%s497 + $0x8] sm:$0xff]
  %v500 = vmul.f32 %v496, %v498
  %v501 = vmul.f32 %v495, %v499
  %v502 = vrot.slane %v490, 6
  %v503 = vrot.slane %v491, 6
  %v504 = vsel %vm114, %v502, %v503
  %v505 = vsel %vm114, %v503, %v502
  %s506 = scalar_lea.vmem %s3, 96
  %v507 = vld [vmem:[%s506] sm:$0xff]
  %v508 = vld [vmem:[%s506 + $0x8] sm:$0xff]
  %v509 = vmul.f32 %v505, %v507
  %v510 = vmul.f32 %v504, %v508
  %v511 = vrot.slane %v490, 2
  %v512 = vrot.slane %v491, 2
  %v513 = vsel %vm143, %v511, %v512
  %v514 = vsel %vm143, %v512, %v511
  %s515 = scalar_lea.vmem %s3, 128
  %v516 = vld [vmem:[%s515] sm:$0xff]
  %v517 = vld [vmem:[%s515 + $0x8] sm:$0xff]
  %v518 = vmul.f32 %v513, %v516
  %v519 = vmul.f32 %v514, %v517
  %s520 = scalar_lea.vmem %s3, 144
  %v521 = vld [vmem:[%s520] sm:$0xff]
  %v522 = vld [vmem:[%s520 + $0x8] sm:$0xff]
  %v523 = vmul.f32 %v495, %v521
  %v524 = vmul.f32 %v496, %v522
  %527 = vrot.lane.b32.xlu0 %v509, 64
  %v528 = vpop.permute.xlu0 %527
  %529 = vrot.lane.b32.xlu0 %v510, 64
  %v530 = vpop.permute.xlu0 %529
  %535 = vrot.lane.b32.xlu0 %v518, 64
  %v536 = vpop.permute.xlu0 %535
  %537 = vrot.lane.b32.xlu0 %v519, 64
  %v538 = vpop.permute.xlu0 %537
  %v541 = vsel %vm167, %v500, %v528
  %v542 = vsel %vm167, %v501, %v530
  %v543 = vsel %vm167, %v490, %v536
  %v544 = vsel %vm167, %v491, %v538
  %v545 = vpack.c.bf16 %v542, %v541
  %v546 = vpack.c.bf16 %v544, %v543
  %v547 = vpack.c.bf16 %v524, %v523
  %s548 = scalar_lea.vmem %s7, 160
  %v549 = vld [vmem:[%s548] sm:$0xf]
  %v550 = vld [vmem:[%s548 + $0x4] sm:$0xf]
  %v551 = vld [vmem:[%s548 + $0x8] sm:$0xf]
  %v552 = vld [vmem:[%s548 + $0xc] sm:$0xf]
  %v553 = vld [vmem:[%s548 + $0x10] sm:$0xf]
  %v554 = vld [vmem:[%s548 + $0x14] sm:$0xf]
  %v555 = vld [vmem:[%s548 + $0x18] sm:$0xf]
  %v556 = vld [vmem:[%s548 + $0x1c] sm:$0xf]
  %v557 = vld [vmem:[%s548 + $0x20] sm:$0xf]
  %v558 = vld [vmem:[%s548 + $0x24] sm:$0xf]
  %v559 = vld [vmem:[%s548 + $0x28] sm:$0xf]
  %v560 = vld [vmem:[%s548 + $0x2c] sm:$0xf]
  %v561 = vld [vmem:[%s548 + $0x30] sm:$0xf]
  %v562 = vld [vmem:[%s548 + $0x34] sm:$0xf]
  %v563 = vld [vmem:[%s548 + $0x38] sm:$0xf]
  %v564 = vld [vmem:[%s548 + $0x3c] sm:$0xf]
  %v565 = vld [vmem:[%s548 + $0x40] sm:$0xf]
  %v566 = vld [vmem:[%s548 + $0x44] sm:$0xf]
  %v567 = vld [vmem:[%s548 + $0x48] sm:$0xf]
  %v568 = vld [vmem:[%s548 + $0x4c] sm:$0xf]
  %v569 = vld [vmem:[%s548 + $0x50] sm:$0xf]
  %v570 = vld [vmem:[%s548 + $0x54] sm:$0xf]
  %v571 = vld [vmem:[%s548 + $0x58] sm:$0xf]
  %v572 = vld [vmem:[%s548 + $0x5c] sm:$0xf]
  %v573 = vld [vmem:[%s548 + $0x60] sm:$0xf]
  %v574 = vld [vmem:[%s548 + $0x64] sm:$0xf]
  %v575 = vld [vmem:[%s548 + $0x68] sm:$0xf]
  %v576 = vld [vmem:[%s548 + $0x6c] sm:$0xf]
  %v577 = vld [vmem:[%s548 + $0x70] sm:$0xf]
  %v578 = vld [vmem:[%s548 + $0x74] sm:$0xf]
  %v579 = vld [vmem:[%s548 + $0x78] sm:$0xf]
  %v580 = vld [vmem:[%s548 + $0x7c] sm:$0xf]
  %v581 = vld [vmem:[%s548 + $0x80] sm:$0xf]
  %v582 = vld [vmem:[%s548 + $0x84] sm:$0xf]
  %v583 = vld [vmem:[%s548 + $0x88] sm:$0xf]
  %v584 = vld [vmem:[%s548 + $0x8c] sm:$0xf]
  %v585 = vld [vmem:[%s548 + $0x90] sm:$0xf]
  %v586 = vld [vmem:[%s548 + $0x94] sm:$0xf]
  %v587 = vld [vmem:[%s548 + $0x98] sm:$0xf]
  %v588 = vld [vmem:[%s548 + $0x9c] sm:$0xf]
  %s589 = scalar_lea.vmem %s8, 1
  %v590 = vld [vmem:[%s589] sm:$0x1]
  %v592 = vperm.slane %v590, 0
  %v634 = vunpack.c.l.b16 %v549
  %v635 = vunpack.c.l.b16 %v550
  %v636 = vunpack.c.l.b16 %v551
  %v637 = vunpack.c.l.b16 %v552
  %v638 = vunpack.c.l.b16 %v553
  %v639 = vunpack.c.l.b16 %v554
  %v640 = vunpack.c.l.b16 %v555
  %v641 = vunpack.c.l.b16 %v556
  %v642 = vunpack.c.l.b16 %v557
  %v643 = vunpack.c.l.b16 %v558
  %v644 = vunpack.c.l.b16 %v559
  %v645 = vunpack.c.l.b16 %v560
  %v646 = vunpack.c.l.b16 %v561
  %v647 = vunpack.c.l.b16 %v562
  %v648 = vunpack.c.l.b16 %v563
  %v649 = vunpack.c.l.b16 %v564
  %v650 = vunpack.c.l.b16 %v565
  %v651 = vunpack.c.l.b16 %v566
  %v652 = vunpack.c.l.b16 %v567
  %v653 = vunpack.c.l.b16 %v568
  %v654 = vunpack.c.l.b16 %v569
  %v655 = vunpack.c.l.b16 %v570
  %v656 = vunpack.c.l.b16 %v571
  %v657 = vunpack.c.l.b16 %v572
  %v658 = vunpack.c.l.b16 %v573
  %v659 = vunpack.c.l.b16 %v574
  %v660 = vunpack.c.l.b16 %v575
  %v661 = vunpack.c.l.b16 %v576
  %v662 = vunpack.c.l.b16 %v577
  %v663 = vunpack.c.l.b16 %v578
  %v664 = vunpack.c.l.b16 %v579
  %v665 = vunpack.c.l.b16 %v580
  %v666 = vunpack.c.l.b16 %v581
  %v667 = vunpack.c.l.b16 %v582
  %v668 = vunpack.c.l.b16 %v583
  %v669 = vunpack.c.l.b16 %v584
  %v670 = vunpack.c.l.b16 %v585
  %v671 = vunpack.c.l.b16 %v586
  %v672 = vunpack.c.l.b16 %v587
  %v673 = vunpack.c.l.b16 %v588
  %v674 = vpack.c.b16 %v635, %v634
  %v675 = vpack.c.b16 %v637, %v636
  %v676 = vpack.c.b16 %v639, %v638
  %v677 = vpack.c.b16 %v641, %v640
  %v678 = vpack.c.b16 %v643, %v642
  %v679 = vpack.c.b16 %v645, %v644
  %v680 = vpack.c.b16 %v647, %v646
  %v681 = vpack.c.b16 %v649, %v648
  %v682 = vpack.c.b16 %v651, %v650
  %v683 = vpack.c.b16 %v653, %v652
  %v684 = vpack.c.b16 %v655, %v654
  %v685 = vpack.c.b16 %v657, %v656
  %v686 = vpack.c.b16 %v659, %v658
  %v687 = vpack.c.b16 %v661, %v660
  %v688 = vpack.c.b16 %v663, %v662
  %v689 = vpack.c.b16 %v665, %v664
  %v690 = vpack.c.b16 %v667, %v666
  %v691 = vpack.c.b16 %v669, %v668
  %v692 = vpack.c.b16 %v671, %v670
  %v693 = vpack.c.b16 %v673, %v672
  %v715 = vsel %vm167, %v547, 0
  %717 = vmatpush.bf16.msra.mxu0 %v681
  %718 = vmatpush.bf16.msra.mxu0 %v680
  %719 = vmatpush.bf16.msra.mxu0 %v679
  %720 = vmatpush.bf16.msra.mxu0 %v678
  %721 = vmatpush.bf16.msra.mxu0 %v677
  %722 = vmatpush.bf16.msra.mxu0 %v676
  %723 = vmatpush.bf16.msra.mxu0 %v675
  %724 = vmatpush.bf16.msra.mxu0 %v674
  %725 = vmatmul.bf16.gmra.mxu0 %v545
  %v726 = vpop.f32.mrf.mxu0
  %v727 = vadd.f32 %v592, %v726
  %v728 = vpop.f32.mrf.mxu0
  %v729 = vadd.f32 %v592, %v728
  %730 = vdwg.mxu0
  %731 = vmatpush.bf16.msra.mxu0 %v689
  %732 = vmatpush.bf16.msra.mxu0 %v688
  %733 = vmatpush.bf16.msra.mxu0 %v687
  %734 = vmatpush.bf16.msra.mxu0 %v686
  %735 = vmatpush.bf16.msra.mxu0 %v685
  %736 = vmatpush.bf16.msra.mxu0 %v684
  %737 = vmatpush.bf16.msra.mxu0 %v683
  %738 = vmatpush.bf16.msra.mxu0 %v682
  %739 = vmatmul.bf16.gmra.mxu0 %v546
  %v740 = vpop.f32.mrf.mxu0
  %v741 = vadd.f32 %v727, %v740
  %v742 = vpop.f32.mrf.mxu0
  %v743 = vadd.f32 %v729, %v742
  %744 = vdwg.mxu0
  %745 = vmatpush.bf16.msra.mxu0 0
  %746 = vmatpush.bf16.msra.mxu0 0
  %747 = vmatpush.bf16.msra.mxu0 0
  %748 = vmatpush.bf16.msra.mxu0 0
  %749 = vmatpush.bf16.msra.mxu0 %v693
  %750 = vmatpush.bf16.msra.mxu0 %v692
  %751 = vmatpush.bf16.msra.mxu0 %v691
  %752 = vmatpush.bf16.msra.mxu0 %v690
  %753 = vmatmul.bf16.gmra.mxu0 %v715
  %v754 = vpop.f32.mrf.mxu0
  %v755 = vadd.f32 %v741, %v754
  %v756 = vpop.f32.mrf.mxu0
  %v757 = vadd.f32 %v743, %v756
  %758 = vdwg.mxu0
  %v759 = vtanh.pop %v755
  %v760 = vtanh.pop %v757
  %v761 = vxor.u32 %v755, 2147483648
  %v762 = vxor.u32 %v757, 2147483648
  %v763 = vmul.f32 %v761, 1.442695
  %v764 = vpow.pop %v763
  %v765 = vmul.f32 %v762, 1.442695
  %v766 = vpow.pop %v765
  %v767 = vadd.f32 %v764, 1.0
  %v768 = vadd.f32 %v766, 1.0
  %v769 = vrcp.pop %v767
  %v770 = vmul.f32 %v767, %v769
  %v771 = vsub.f32 1.0, %v770
  %v772 = vmul.f32 %v769, %v771
  %v773 = vadd.f32 %v769, %v772
  %vm774 = vweird.f32 %v767
  %vm775 = vweird.f32 %v769
  %vm776 = vmor %vm774, %vm775
  %v777 = vsel %vm776, %v769, %v773
  %v778 = vand.u32 2147483647, %v767
  %vm779 = vcmp.eq.f32.partialorder %v778, 8.507059e+37
  %v780 = vand.u32 %v767, 2147483648
  %v781 = vor.u32 1.1754944e-38, %v780
  %v782 = vsel %vm779, %v781, %v777
  %v783 = vmul.f32 1.0, %v782
  %v784 = vrcp.pop %v768
  %v785 = vmul.f32 %v768, %v784
  %v786 = vsub.f32 1.0, %v785
  %v787 = vmul.f32 %v784, %v786
  %v788 = vadd.f32 %v784, %v787
  %vm789 = vweird.f32 %v768
  %vm790 = vweird.f32 %v784
  %vm791 = vmor %vm789, %vm790
  %v792 = vsel %vm791, %v784, %v788
  %v793 = vand.u32 2147483647, %v768
  %vm794 = vcmp.eq.f32.partialorder %v793, 8.507059e+37
  %v795 = vand.u32 %v768, 2147483648
  %v796 = vor.u32 1.1754944e-38, %v795
  %v797 = vsel %vm794, %v796, %v792
  %v798 = vmul.f32 1.0, %v797
  %801 = vrot.lane.b32.xlu0 %v783, 64
  %v802 = vpop.permute.xlu0 %801
  %803 = vrot.lane.b32.xlu0 %v798, 64
  %v804 = vpop.permute.xlu0 %803
  %v807 = vmul.f32 %v759, %v802
  %v808 = vmul.f32 %v760, %v804
  %v809 = vpack.c.bf16 %v808, %v807
  %s810 = scalar_lea.vmem %s9, 32
  %v811 = vld [vmem:[%s810] sm:$0xf]
  %v812 = vld [vmem:[%s810 + $0x4] sm:$0xf]
  %v813 = vld [vmem:[%s810 + $0x8] sm:$0xf]
  %v814 = vld [vmem:[%s810 + $0xc] sm:$0xf]
  %v815 = vld [vmem:[%s810 + $0x10] sm:$0xf]
  %v816 = vld [vmem:[%s810 + $0x14] sm:$0xf]
  %v817 = vld [vmem:[%s810 + $0x18] sm:$0xf]
  %v818 = vld [vmem:[%s810 + $0x1c] sm:$0xf]
  %s819 = scalar_lea.vmem %s10, 1
  %v820 = vld [vmem:[%s819] sm:$0x1]
  %v822 = vperm.slane %v820, 0
  %v832 = vunpack.c.l.b16 %v811
  %v833 = vunpack.c.l.b16 %v812
  %v834 = vunpack.c.l.b16 %v813
  %v835 = vunpack.c.l.b16 %v814
  %v836 = vunpack.c.l.b16 %v815
  %v837 = vunpack.c.l.b16 %v816
  %v838 = vunpack.c.l.b16 %v817
  %v839 = vunpack.c.l.b16 %v818
  %v840 = vpack.c.b16 %v833, %v832
  %v841 = vpack.c.b16 %v835, %v834
  %v842 = vpack.c.b16 %v837, %v836
  %v843 = vpack.c.b16 %v839, %v838
  %v849 = vsel %vm167, %v809, 0
  %851 = vmatpush.bf16.msra.mxu0 0
  %852 = vmatpush.bf16.msra.mxu0 0
  %853 = vmatpush.bf16.msra.mxu0 0
  %854 = vmatpush.bf16.msra.mxu0 0
  %855 = vmatpush.bf16.msra.mxu0 %v843
  %856 = vmatpush.bf16.msra.mxu0 %v842
  %857 = vmatpush.bf16.msra.mxu0 %v841
  %858 = vmatpush.bf16.msra.mxu0 %v840
  %859 = vmatmul.bf16.gmra.mxu0 %v849
  %v860 = vpop.f32.mrf.mxu0
  %v861 = vadd.f32 %v822, %v860
  %v862 = vpop.f32.mrf.mxu0
  %v863 = vadd.f32 %v822, %v862
  %864 = vdwg.mxu0
  %v865 = vadd.f32 %v484, %v861
  %v866 = vadd.f32 %v486, %v863
  %v867 = vmul.f32 %v865, %v62
  %v868 = vmul.f32 %v866, %v67
  %871 = vrot.lane.b32.xlu0 %v867, 96
  %v872 = vpop.permute.xlu0 %871
  %873 = vrot.lane.b32.xlu0 %v868, 96
  %v874 = vpop.permute.xlu0 %873
  %v877 = vadd.f32 %v867, %v872
  %v878 = vadd.f32 %v868, %v874
  %881 = vrot.lane.b32.xlu0 %v877, 64
  %v882 = vpop.permute.xlu0 %881
  %883 = vrot.lane.b32.xlu0 %v878, 64
  %v884 = vpop.permute.xlu0 %883
  %v887 = vrot.slane %v882, 6
  %v888 = vrot.slane %v884, 6
  %v889 = vsel %vm114, %v887, %v888
  %v890 = vsel %vm114, %v888, %v887
  %v891 = vld [vmem:[%s4] sm:$0xff]
  %v892 = vld [vmem:[%s4 + $0x8] sm:$0xff]
  %v893 = vmul.f32 %v890, %v891
  %v894 = vmul.f32 %v889, %v892
  %v895 = vrot.slane %v882, 7
  %v896 = vrot.slane %v884, 7
  %v897 = vsel %vm123, %v895, %v896
  %v898 = vsel %vm123, %v896, %v895
  %s899 = scalar_lea.vmem %s4, 16
  %v900 = vld [vmem:[%s899] sm:$0xff]
  %v901 = vld [vmem:[%s899 + $0x8] sm:$0xff]
  %v902 = vmul.f32 %v898, %v900
  %v903 = vmul.f32 %v897, %v901
  %v904 = vrot.slane %v882, 1
  %v905 = vrot.slane %v884, 1
  %v906 = vsel %vm133, %v904, %v905
  %v907 = vsel %vm133, %v905, %v904
  %s908 = scalar_lea.vmem %s4, 48
  %v909 = vld [vmem:[%s908] sm:$0xff]
  %v910 = vld [vmem:[%s908 + $0x8] sm:$0xff]
  %v911 = vmul.f32 %v906, %v909
  %v912 = vmul.f32 %v907, %v910
  %v913 = vrot.slane %v882, 2
  %v914 = vrot.slane %v884, 2
  %v915 = vsel %vm143, %v913, %v914
  %v916 = vsel %vm143, %v914, %v913
  %s917 = scalar_lea.vmem %s4, 64
  %v918 = vld [vmem:[%s917] sm:$0xff]
  %v919 = vld [vmem:[%s917 + $0x8] sm:$0xff]
  %v920 = vmul.f32 %v915, %v918
  %v921 = vmul.f32 %v916, %v919
  %924 = vrot.lane.b32.xlu0 %v902, 32
  %v925 = vpop.permute.xlu0 %924
  %926 = vrot.lane.b32.xlu0 %v903, 32
  %v927 = vpop.permute.xlu0 %926
  %932 = vrot.lane.b32.xlu0 %v911, 96
  %v933 = vpop.permute.xlu0 %932
  %934 = vrot.lane.b32.xlu0 %v912, 96
  %v935 = vpop.permute.xlu0 %934
  %vm938 = vcmask 261120
  %v939 = vsel %vm938, %v893, %v925
  %v940 = vsel %vm938, %v894, %v927
  %v941 = vsel %vm167, %v939, %v877
  %v942 = vsel %vm167, %v940, %v878
  %vm943 = vcmask 785408
  %v944 = vsel %vm943, %v941, %v933
  %v945 = vsel %vm943, %v942, %v935
  %v946 = vpack.c.bf16 %v945, %v944
  %v947 = vpack.c.bf16 %v921, %v920
  %v948 = vld [vmem:[%s11] sm:$0xf]
  %v949 = vld [vmem:[%s11 + $0x4] sm:$0xf]
  %v950 = vld [vmem:[%s11 + $0x8] sm:$0xf]
  %v951 = vld [vmem:[%s11 + $0xc] sm:$0xf]
  %v952 = vld [vmem:[%s11 + $0x10] sm:$0xf]
  %v953 = vld [vmem:[%s11 + $0x14] sm:$0xf]
  %v954 = vld [vmem:[%s11 + $0x18] sm:$0xf]
  %v955 = vld [vmem:[%s11 + $0x1c] sm:$0xf]
  %v956 = vld [vmem:[%s11 + $0x20] sm:$0xf]
  %v957 = vld [vmem:[%s11 + $0x24] sm:$0xf]
  %v958 = vld [vmem:[%s11 + $0x28] sm:$0xf]
  %v959 = vld [vmem:[%s11 + $0x2c] sm:$0xf]
  %v960 = vld [vmem:[%s11 + $0x30] sm:$0xf]
  %v961 = vld [vmem:[%s11 + $0x34] sm:$0xf]
  %v962 = vld [vmem:[%s11 + $0x38] sm:$0xf]
  %v963 = vld [vmem:[%s11 + $0x3c] sm:$0xf]
  %v964 = vld [vmem:[%s11 + $0x40] sm:$0xf]
  %v965 = vld [vmem:[%s11 + $0x44] sm:$0xf]
  %v966 = vld [vmem:[%s11 + $0x48] sm:$0xf]
  %v967 = vld [vmem:[%s11 + $0x4c] sm:$0xf]
  %v968 = vld [vmem:[%s12] sm:$0x1]
  %v970 = vperm.slane %v968, 0
  %v992 = vunpack.c.l.b16 %v948
  %v993 = vunpack.c.l.b16 %v949
  %v994 = vunpack.c.l.b16 %v950
  %v995 = vunpack.c.l.b16 %v951
  %v996 = vunpack.c.l.b16 %v952
  %v997 = vunpack.c.l.b16 %v953
  %v998 = vunpack.c.l.b16 %v954
  %v999 = vunpack.c.l.b16 %v955
  %v1000 = vunpack.c.l.b16 %v956
  %v1001 = vunpack.c.l.b16 %v957
  %v1002 = vunpack.c.l.b16 %v958
  %v1003 = vunpack.c.l.b16 %v959
  %v1004 = vunpack.c.l.b16 %v960
  %v1005 = vunpack.c.l.b16 %v961
  %v1006 = vunpack.c.l.b16 %v962
  %v1007 = vunpack.c.l.b16 %v963
  %v1008 = vunpack.c.l.b16 %v964
  %v1009 = vunpack.c.l.b16 %v965
  %v1010 = vunpack.c.l.b16 %v966
  %v1011 = vunpack.c.l.b16 %v967
  %v1012 = vpack.c.b16 %v993, %v992
  %v1013 = vpack.c.b16 %v995, %v994
  %v1014 = vpack.c.b16 %v997, %v996
  %v1015 = vpack.c.b16 %v999, %v998
  %v1016 = vpack.c.b16 %v1001, %v1000
  %v1017 = vpack.c.b16 %v1003, %v1002
  %v1018 = vpack.c.b16 %v1005, %v1004
  %v1019 = vpack.c.b16 %v1007, %v1006
  %v1020 = vpack.c.b16 %v1009, %v1008
  %v1021 = vpack.c.b16 %v1011, %v1010
  %v1033 = vsel %vm938, %v947, 0
  %1035 = vmatpush.bf16.msra.mxu0 %v1019
  %1036 = vmatpush.bf16.msra.mxu0 %v1018
  %1037 = vmatpush.bf16.msra.mxu0 %v1017
  %1038 = vmatpush.bf16.msra.mxu0 %v1016
  %1039 = vmatpush.bf16.msra.mxu0 %v1015
  %1040 = vmatpush.bf16.msra.mxu0 %v1014
  %1041 = vmatpush.bf16.msra.mxu0 %v1013
  %1042 = vmatpush.bf16.msra.mxu0 %v1012
  %1043 = vmatmul.bf16.gmra.mxu0 %v946
  %v1044 = vpop.f32.mrf.mxu0
  %v1045 = vadd.f32 %v970, %v1044
  %v1046 = vpop.f32.mrf.mxu0
  %v1047 = vadd.f32 %v970, %v1046
  %1048 = vdwg.mxu0
  %1049 = vmatpush.bf16.msra.mxu0 0
  %1050 = vmatpush.bf16.msra.mxu0 0
  %1051 = vmatpush.bf16.msra.mxu0 0
  %1052 = vmatpush.bf16.msra.mxu0 0
  %1053 = vmatpush.bf16.msra.mxu0 0
  %1054 = vmatpush.bf16.msra.mxu0 0
  %1055 = vmatpush.bf16.msra.mxu0 %v1021
  %1056 = vmatpush.bf16.msra.mxu0 %v1020
  %1057 = vmatmul.bf16.gmra.mxu0 %v1033
  %v1058 = vpop.f32.mrf.mxu0
  %v1059 = vadd.f32 %v1045, %v1058
  %v1060 = vpop.f32.mrf.mxu0
  %v1061 = vadd.f32 %v1047, %v1060
  %1062 = vdwg.mxu0
  %v1063 = vtanh.pop %v1059
  %v1064 = vtanh.pop %v1061
  %v1065 = vxor.u32 %v1059, 2147483648
  %v1066 = vxor.u32 %v1061, 2147483648
  %v1067 = vmul.f32 %v1065, 1.442695
  %v1068 = vpow.pop %v1067
  %v1069 = vmul.f32 %v1066, 1.442695
  %v1070 = vpow.pop %v1069
  %v1071 = vadd.f32 %v1068, 1.0
  %v1072 = vadd.f32 %v1070, 1.0
  %v1073 = vrcp.pop %v1071
  %v1074 = vmul.f32 %v1071, %v1073
  %v1075 = vsub.f32 1.0, %v1074
  %v1076 = vmul.f32 %v1073, %v1075
  %v1077 = vadd.f32 %v1073, %v1076
  %vm1078 = vweird.f32 %v1071
  %vm1079 = vweird.f32 %v1073
  %vm1080 = vmor %vm1078, %vm1079
  %v1081 = vsel %vm1080, %v1073, %v1077
  %v1082 = vand.u32 2147483647, %v1071
  %vm1083 = vcmp.eq.f32.partialorder %v1082, 8.507059e+37
  %v1084 = vand.u32 %v1071, 2147483648
  %v1085 = vor.u32 1.1754944e-38, %v1084
  %v1086 = vsel %vm1083, %v1085, %v1081
  %v1087 = vmul.f32 1.0, %v1086
  %v1088 = vrcp.pop %v1072
  %v1089 = vmul.f32 %v1072, %v1088
  %v1090 = vsub.f32 1.0, %v1089
  %v1091 = vmul.f32 %v1088, %v1090
  %v1092 = vadd.f32 %v1088, %v1091
  %vm1093 = vweird.f32 %v1072
  %vm1094 = vweird.f32 %v1088
  %vm1095 = vmor %vm1093, %vm1094
  %v1096 = vsel %vm1095, %v1088, %v1092
  %v1097 = vand.u32 2147483647, %v1072
  %vm1098 = vcmp.eq.f32.partialorder %v1097, 8.507059e+37
  %v1099 = vand.u32 %v1072, 2147483648
  %v1100 = vor.u32 1.1754944e-38, %v1099
  %v1101 = vsel %vm1098, %v1100, %v1096
  %v1102 = vmul.f32 1.0, %v1101
  %1105 = vrot.lane.b32.xlu0 %v1087, 96
  %v1106 = vpop.permute.xlu0 %1105
  %1107 = vrot.lane.b32.xlu0 %v1102, 96
  %v1108 = vpop.permute.xlu0 %1107
  %v1111 = vmul.f32 %v1063, %v1106
  %v1112 = vmul.f32 %v1064, %v1108
  %v1113 = vpack.c.bf16 %v1112, %v1111
  %v1114 = vld [vmem:[%s13] sm:$0xf]
  %v1115 = vld [vmem:[%s13 + $0x4] sm:$0xf]
  %v1116 = vld [vmem:[%s13 + $0x8] sm:$0xf]
  %v1117 = vld [vmem:[%s13 + $0xc] sm:$0xf]
  %v1118 = vld [vmem:[%s14] sm:$0x1]
  %v1120 = vperm.slane %v1118, 0
  %v1126 = vunpack.c.l.b16 %v1114
  %v1127 = vunpack.c.l.b16 %v1115
  %v1128 = vunpack.c.l.b16 %v1116
  %v1129 = vunpack.c.l.b16 %v1117
  %v1130 = vpack.c.b16 %v1127, %v1126
  %v1131 = vpack.c.b16 %v1129, %v1128
  %v1135 = vsel %vm938, %v1113, 0
  %1137 = vmatpush.bf16.msra.mxu0 0
  %1138 = vmatpush.bf16.msra.mxu0 0
  %1139 = vmatpush.bf16.msra.mxu0 0
  %1140 = vmatpush.bf16.msra.mxu0 0
  %1141 = vmatpush.bf16.msra.mxu0 0
  %1142 = vmatpush.bf16.msra.mxu0 0
  %1143 = vmatpush.bf16.msra.mxu0 %v1131
  %1144 = vmatpush.bf16.msra.mxu0 %v1130
  %1145 = vmatmul.bf16.gmra.mxu0 %v1135
  %v1146 = vpop.f32.mrf.mxu0
  %v1147 = vadd.f32 %v1120, %v1146
  %v1148 = vpop.f32.mrf.mxu0
  %v1149 = vadd.f32 %v1120, %v1148
  %1150 = vdwg.mxu0
  %1153 = vrot.lane.b32.xlu0 %v1147, 64
  %v1154 = vpop.permute.xlu0 %1153
  %1155 = vrot.lane.b32.xlu0 %v1149, 64
  %v1156 = vpop.permute.xlu0 %1155
  %v1159 = vadd.f32 %v877, %v1154
  %v1160 = vadd.f32 %v878, %v1156
  %v1161 = vmul.f32 %v1159, %v62
  %v1162 = vmul.f32 %v1160, %v67
  %1165 = vrot.lane.b32.xlu0 %v1161, 64
  %v1166 = vpop.permute.xlu0 %1165
  %1167 = vrot.lane.b32.xlu0 %v1162, 64
  %v1168 = vpop.permute.xlu0 %1167
  %v1171 = vrot.slane %v1166, 4
  %v1172 = vrot.slane %v1168, 4
  %v1173 = vsel %vm494, %v1171, %v1172
  %v1174 = vsel %vm494, %v1172, %v1171
  %s1175 = scalar_lea.vmem %s4, 80
  %v1176 = vld [vmem:[%s1175] sm:$0xff]
  %v1177 = vld [vmem:[%s1175 + $0x8] sm:$0xff]
  %v1178 = vmul.f32 %v1174, %v1176
  %v1179 = vmul.f32 %v1173, %v1177
  %v1180 = vrot.slane %v1166, 6
  %v1181 = vrot.slane %v1168, 6
  %v1182 = vsel %vm114, %v1180, %v1181
  %v1183 = vsel %vm114, %v1181, %v1180
  %s1184 = scalar_lea.vmem %s4, 96
  %v1185 = vld [vmem:[%s1184] sm:$0xff]
  %v1186 = vld [vmem:[%s1184 + $0x8] sm:$0xff]
  %v1187 = vmul.f32 %v1183, %v1185
  %v1188 = vmul.f32 %v1182, %v1186
  %v1189 = vrot.slane %v1166, 2
  %v1190 = vrot.slane %v1168, 2
  %v1191 = vsel %vm143, %v1189, %v1190
  %v1192 = vsel %vm143, %v1190, %v1189
  %s1193 = scalar_lea.vmem %s4, 128
  %v1194 = vld [vmem:[%s1193] sm:$0xff]
  %v1195 = vld [vmem:[%s1193 + $0x8] sm:$0xff]
  %v1196 = vmul.f32 %v1191, %v1194
  %v1197 = vmul.f32 %v1192, %v1195
  %s1198 = scalar_lea.vmem %s4, 144
  %v1199 = vld [vmem:[%s1198] sm:$0xff]
  %v1200 = vld [vmem:[%s1198 + $0x8] sm:$0xff]
  %v1201 = vmul.f32 %v1173, %v1199
  %v1202 = vmul.f32 %v1174, %v1200
  %1205 = vrot.lane.b32.xlu0 %v1187, 32
  %v1206 = vpop.permute.xlu0 %1205
  %1207 = vrot.lane.b32.xlu0 %v1188, 32
  %v1208 = vpop.permute.xlu0 %1207
  %1213 = vrot.lane.b32.xlu0 %v1196, 96
  %v1214 = vpop.permute.xlu0 %1213
  %1215 = vrot.lane.b32.xlu0 %v1197, 96
  %v1216 = vpop.permute.xlu0 %1215
  %v1219 = vsel %vm938, %v1178, %v1206
  %v1220 = vsel %vm938, %v1179, %v1208
  %v1221 = vsel %vm167, %v1219, %v1161
  %v1222 = vsel %vm167, %v1220, %v1162
  %v1223 = vsel %vm943, %v1221, %v1214
  %v1224 = vsel %vm943, %v1222, %v1216
  %v1225 = vpack.c.bf16 %v1224, %v1223
  %v1226 = vpack.c.bf16 %v1202, %v1201
  %s1227 = scalar_lea.vmem %s11, 80
  %v1228 = vld [vmem:[%s1227] sm:$0xf]
  %v1229 = vld [vmem:[%s1227 + $0x4] sm:$0xf]
  %v1230 = vld [vmem:[%s1227 + $0x8] sm:$0xf]
  %v1231 = vld [vmem:[%s1227 + $0xc] sm:$0xf]
  %v1232 = vld [vmem:[%s1227 + $0x10] sm:$0xf]
  %v1233 = vld [vmem:[%s1227 + $0x14] sm:$0xf]
  %v1234 = vld [vmem:[%s1227 + $0x18] sm:$0xf]
  %v1235 = vld [vmem:[%s1227 + $0x1c] sm:$0xf]
  %v1236 = vld [vmem:[%s1227 + $0x20] sm:$0xf]
  %v1237 = vld [vmem:[%s1227 + $0x24] sm:$0xf]
  %v1238 = vld [vmem:[%s1227 + $0x28] sm:$0xf]
  %v1239 = vld [vmem:[%s1227 + $0x2c] sm:$0xf]
  %v1240 = vld [vmem:[%s1227 + $0x30] sm:$0xf]
  %v1241 = vld [vmem:[%s1227 + $0x34] sm:$0xf]
  %v1242 = vld [vmem:[%s1227 + $0x38] sm:$0xf]
  %v1243 = vld [vmem:[%s1227 + $0x3c] sm:$0xf]
  %v1244 = vld [vmem:[%s1227 + $0x40] sm:$0xf]
  %v1245 = vld [vmem:[%s1227 + $0x44] sm:$0xf]
  %v1246 = vld [vmem:[%s1227 + $0x48] sm:$0xf]
  %v1247 = vld [vmem:[%s1227 + $0x4c] sm:$0xf]
  %s1248 = scalar_lea.vmem %s12, 1
  %v1249 = vld [vmem:[%s1248] sm:$0x1]
  %v1251 = vperm.slane %v1249, 0
  %v1273 = vunpack.c.l.b16 %v1228
  %v1274 = vunpack.c.l.b16 %v1229
  %v1275 = vunpack.c.l.b16 %v1230
  %v1276 = vunpack.c.l.b16 %v1231
  %v1277 = vunpack.c.l.b16 %v1232
  %v1278 = vunpack.c.l.b16 %v1233
  %v1279 = vunpack.c.l.b16 %v1234
  %v1280 = vunpack.c.l.b16 %v1235
  %v1281 = vunpack.c.l.b16 %v1236
  %v1282 = vunpack.c.l.b16 %v1237
  %v1283 = vunpack.c.l.b16 %v1238
  %v1284 = vunpack.c.l.b16 %v1239
  %v1285 = vunpack.c.l.b16 %v1240
  %v1286 = vunpack.c.l.b16 %v1241
  %v1287 = vunpack.c.l.b16 %v1242
  %v1288 = vunpack.c.l.b16 %v1243
  %v1289 = vunpack.c.l.b16 %v1244
  %v1290 = vunpack.c.l.b16 %v1245
  %v1291 = vunpack.c.l.b16 %v1246
  %v1292 = vunpack.c.l.b16 %v1247
  %v1293 = vpack.c.b16 %v1274, %v1273
  %v1294 = vpack.c.b16 %v1276, %v1275
  %v1295 = vpack.c.b16 %v1278, %v1277
  %v1296 = vpack.c.b16 %v1280, %v1279
  %v1297 = vpack.c.b16 %v1282, %v1281
  %v1298 = vpack.c.b16 %v1284, %v1283
  %v1299 = vpack.c.b16 %v1286, %v1285
  %v1300 = vpack.c.b16 %v1288, %v1287
  %v1301 = vpack.c.b16 %v1290, %v1289
  %v1302 = vpack.c.b16 %v1292, %v1291
  %v1314 = vsel %vm938, %v1226, 0
  %1316 = vmatpush.bf16.msra.mxu0 %v1300
  %1317 = vmatpush.bf16.msra.mxu0 %v1299
  %1318 = vmatpush.bf16.msra.mxu0 %v1298
  %1319 = vmatpush.bf16.msra.mxu0 %v1297
  %1320 = vmatpush.bf16.msra.mxu0 %v1296
  %1321 = vmatpush.bf16.msra.mxu0 %v1295
  %1322 = vmatpush.bf16.msra.mxu0 %v1294
  %1323 = vmatpush.bf16.msra.mxu0 %v1293
  %1324 = vmatmul.bf16.gmra.mxu0 %v1225
  %v1325 = vpop.f32.mrf.mxu0
  %v1326 = vadd.f32 %v1251, %v1325
  %v1327 = vpop.f32.mrf.mxu0
  %v1328 = vadd.f32 %v1251, %v1327
  %1329 = vdwg.mxu0
  %1330 = vmatpush.bf16.msra.mxu0 0
  %1331 = vmatpush.bf16.msra.mxu0 0
  %1332 = vmatpush.bf16.msra.mxu0 0
  %1333 = vmatpush.bf16.msra.mxu0 0
  %1334 = vmatpush.bf16.msra.mxu0 0
  %1335 = vmatpush.bf16.msra.mxu0 0
  %1336 = vmatpush.bf16.msra.mxu0 %v1302
  %1337 = vmatpush.bf16.msra.mxu0 %v1301
  %1338 = vmatmul.bf16.gmra.mxu0 %v1314
  %v1339 = vpop.f32.mrf.mxu0
  %v1340 = vadd.f32 %v1326, %v1339
  %v1341 = vpop.f32.mrf.mxu0
  %v1342 = vadd.f32 %v1328, %v1341
  %1343 = vdwg.mxu0
  %v1344 = vtanh.pop %v1340
  %v1345 = vtanh.pop %v1342
  %v1346 = vxor.u32 %v1340, 2147483648
  %v1347 = vxor.u32 %v1342, 2147483648
  %v1348 = vmul.f32 %v1346, 1.442695
  %v1349 = vpow.pop %v1348
  %v1350 = vmul.f32 %v1347, 1.442695
  %v1351 = vpow.pop %v1350
  %v1352 = vadd.f32 %v1349, 1.0
  %v1353 = vadd.f32 %v1351, 1.0
  %v1354 = vrcp.pop %v1352
  %v1355 = vmul.f32 %v1352, %v1354
  %v1356 = vsub.f32 1.0, %v1355
  %v1357 = vmul.f32 %v1354, %v1356
  %v1358 = vadd.f32 %v1354, %v1357
  %vm1359 = vweird.f32 %v1352
  %vm1360 = vweird.f32 %v1354
  %vm1361 = vmor %vm1359, %vm1360
  %v1362 = vsel %vm1361, %v1354, %v1358
  %v1363 = vand.u32 2147483647, %v1352
  %vm1364 = vcmp.eq.f32.partialorder %v1363, 8.507059e+37
  %v1365 = vand.u32 %v1352, 2147483648
  %v1366 = vor.u32 1.1754944e-38, %v1365
  %v1367 = vsel %vm1364, %v1366, %v1362
  %v1368 = vmul.f32 1.0, %v1367
  %v1369 = vrcp.pop %v1353
  %v1370 = vmul.f32 %v1353, %v1369
  %v1371 = vsub.f32 1.0, %v1370
  %v1372 = vmul.f32 %v1369, %v1371
  %v1373 = vadd.f32 %v1369, %v1372
  %vm1374 = vweird.f32 %v1353
  %vm1375 = vweird.f32 %v1369
  %vm1376 = vmor %vm1374, %vm1375
  %v1377 = vsel %vm1376, %v1369, %v1373
  %v1378 = vand.u32 2147483647, %v1353
  %vm1379 = vcmp.eq.f32.partialorder %v1378, 8.507059e+37
  %v1380 = vand.u32 %v1353, 2147483648
  %v1381 = vor.u32 1.1754944e-38, %v1380
  %v1382 = vsel %vm1379, %v1381, %v1377
  %v1383 = vmul.f32 1.0, %v1382
  %1386 = vrot.lane.b32.xlu0 %v1368, 96
  %v1387 = vpop.permute.xlu0 %1386
  %1388 = vrot.lane.b32.xlu0 %v1383, 96
  %v1389 = vpop.permute.xlu0 %1388
  %v1392 = vmul.f32 %v1344, %v1387
  %v1393 = vmul.f32 %v1345, %v1389
  %v1394 = vpack.c.bf16 %v1393, %v1392
  %s1395 = scalar_lea.vmem %s13, 16
  %v1396 = vld [vmem:[%s1395] sm:$0xf]
  %v1397 = vld [vmem:[%s1395 + $0x4] sm:$0xf]
  %v1398 = vld [vmem:[%s1395 + $0x8] sm:$0xf]
  %v1399 = vld [vmem:[%s1395 + $0xc] sm:$0xf]
  %s1400 = scalar_lea.vmem %s14, 1
  %v1401 = vld [vmem:[%s1400] sm:$0x1]
  %v1403 = vperm.slane %v1401, 0
  %v1409 = vunpack.c.l.b16 %v1396
  %v1410 = vunpack.c.l.b16 %v1397
  %v1411 = vunpack.c.l.b16 %v1398
  %v1412 = vunpack.c.l.b16 %v1399
  %v1413 = vpack.c.b16 %v1410, %v1409
  %v1414 = vpack.c.b16 %v1412, %v1411
  %v1418 = vsel %vm938, %v1394, 0
  %1420 = vmatpush.bf16.msra.mxu0 0
  %1421 = vmatpush.bf16.msra.mxu0 0
  %1422 = vmatpush.bf16.msra.mxu0 0
  %1423 = vmatpush.bf16.msra.mxu0 0
  %1424 = vmatpush.bf16.msra.mxu0 0
  %1425 = vmatpush.bf16.msra.mxu0 0
  %1426 = vmatpush.bf16.msra.mxu0 %v1414
  %1427 = vmatpush.bf16.msra.mxu0 %v1413
  %1428 = vmatmul.bf16.gmra.mxu0 %v1418
  %v1429 = vpop.f32.mrf.mxu0
  %v1430 = vadd.f32 %v1403, %v1429
  %v1431 = vpop.f32.mrf.mxu0
  %v1432 = vadd.f32 %v1403, %v1431
  %1433 = vdwg.mxu0
  %v1434 = vadd.f32 %v1147, %v1430
  %v1435 = vadd.f32 %v1149, %v1432
  %v1436 = vmul.f32 %v1434, %v62
  %v1437 = vmul.f32 %v1435, %v67
  %v1438 = vpack.c.bf16 %v1437, %v1436
  %v1439 = vld [vmem:[%s15] sm:$0xf]
  %v1440 = vld [vmem:[%s15 + $0x4] sm:$0xf]
  %v1441 = vld [vmem:[%s15 + $0x8] sm:$0xf]
  %v1442 = vld [vmem:[%s15 + $0xc] sm:$0xf]
  %v1443 = vld [vmem:[%s16] sm:$0x1]
  %v1445 = vperm.slane %v1443, 0
  %1448 = vrot.lane.b32.xlu0 %v1438, 96
  %v1449 = vpop.permute.xlu0 %1448
  %v1454 = vunpack.c.l.b16 %v1439
  %v1455 = vunpack.c.l.b16 %v1440
  %v1456 = vunpack.c.l.b16 %v1441
  %v1457 = vunpack.c.l.b16 %v1442
  %v1458 = vpack.c.b16 %v1455, %v1454
  %v1459 = vpack.c.b16 %v1457, %v1456
  %v1463 = vsel %vm938, %v1449, 0
  %1465 = vmatpush.bf16.msra.mxu0 0
  %1466 = vmatpush.bf16.msra.mxu0 0
  %1467 = vmatpush.bf16.msra.mxu0 0
  %1468 = vmatpush.bf16.msra.mxu0 0
  %1469 = vmatpush.bf16.msra.mxu0 0
  %1470 = vmatpush.bf16.msra.mxu0 0
  %1471 = vmatpush.bf16.msra.mxu0 %v1459
  %1472 = vmatpush.bf16.msra.mxu0 %v1458
  %1473 = vmatmul.bf16.gmra.mxu0 %v1463
  %v1474 = vpop.f32.mrf.mxu0
  %v1475 = vadd.f32 %v1445, %v1474
  %v1476 = vpop.f32.mrf.mxu0
  %v1477 = vadd.f32 %v1445, %v1476
  %1478 = vdwg.mxu0
  %v1479 = vmul.f32 %v1475, %v62
  %v1480 = vmul.f32 %v1477, %v67
  %v1481 = vld [vmem:[%s2] sm:$0xff]
  %v1482 = vld [vmem:[%s2 + $0x8] sm:$0xff]
  %v1483 = vmul.f32 %v1479, 1.442695
  %v1484 = vpow.pop %v1483
  %v1485 = vmul.f32 %v1480, 1.442695
  %v1486 = vpow.pop %v1485
  %1489 = vrot.lane.b32.xlu0 %v1484, 124
  %v1490 = vpop.permute.xlu0 %1489
  %1491 = vrot.lane.b32.xlu0 %v1486, 124
  %v1492 = vpop.permute.xlu0 %1491
  %v1495 = vmul.f32 %v1481, %v1490
  %v1496 = vmul.f32 %v1482, %v1492
  %v1497 = vadd.f32 %v1479, %v1495
  %v1498 = vadd.f32 %v1480, %v1496
  %v1499 = vmul.f32 %v1497, %v62
  %v1500 = vmul.f32 %v1498, %v67
  %1503 = vrot.lane.b32.xlu0 %v1479, 4
  %v1504 = vpop.permute.xlu0 %1503
  %1505 = vrot.lane.b32.xlu0 %v1480, 4
  %v1506 = vpop.permute.xlu0 %1505
  %vm1509 = vcmask 31744
  %v1510 = vsel %vm1509, %v1499, %v1504
  %v1511 = vsel %vm1509, %v1500, %v1506
  %vm1512 = vcmask 64512
  %v1513 = vsel %vm1512, %v1510, %v1504
  %v1514 = vsel %vm1512, %v1511, %v1506
  %vm1515 = vcmask 97280
  %1516 = vst.msk [vmem:[%s17] sm:$0xff] %vm1515, %v1513
  %1517 = vst.msk [vmem:[%s17 + $0x8] sm:$0xff] %vm1515, %v1514
  // Predicated region
  $region70: #{posterior_sf_encoder.1} parent=0 // pred_check
    _
  $region71: #{posterior_sf_encoder.1} parent=0 // pred_check_branch
    %1519 = sbr.rel (0) target = $region73
  $region72: #{posterior_sf_encoder.1} parent=0 // pred_region
    _
  $region73: #{posterior_sf_encoder.1} parent=0 // pred_fallthru
    _
  // Predicated region
  $region74: #{posterior_sf_encoder.1} parent=0 // pred_check
    _
  $region75: #{posterior_sf_encoder.1} parent=0 // pred_check_branch
    %1521 = sbr.rel (0) target = $region77
  $region76: #{posterior_sf_encoder.1} parent=0 // pred_region
    _
  $region77: #{posterior_sf_encoder.1} parent=0 // pred_fallthru
    _

</llo_original>
